<compile_context>
chip_gen: v7x
topology: tpu7x:2x2x1
jax: 0.10.0
libtpu: 0.0.40
codegen_flags: <defaults>
</compile_context>

<pallas_src>
import jax
import jax.numpy as jnp
from jax import lax
from jax.experimental import pallas as pl
from jax.experimental.pallas import tpu as pltpu


NEG_INF = -1e30          # Python float -> jaxpr literal (NOT a captured jnp constant)
LEAKY_SLOPE = 0.2


# ----------------------------------------------------------------------------
# In-kernel helper: dense-adjacency multi-head GAT attention.
# z        : (N, H*f_out) transformed features, heads concatenated along lanes
# asrc_blk : (H, H*f_out) block-diagonal source-attention matrix (row per head)
# adst_blk : (H*f_out, H) block-diagonal target-attention matrix (column per head)
# bias     : (N, N)       additive mask bias: 0 on edges j->i, -1e30 elsewhere
# returns  : list of per-head aggregated features, each (N, f_out)
# ----------------------------------------------------------------------------
def _gat_attention(z, asrc_blk, adst_blk, bias, heads, f_out):
    # Batched attention-score terms for ALL heads (2 MXU ops total, not 2*H):
    e_dst_all = jnp.dot(z, adst_blk, preferred_element_type=jnp.float32)    # (N, H)
    e_src_rows = jnp.einsum('hf,nf->hn', asrc_blk, z,
                            preferred_element_type=jnp.float32)             # (H, N)
    outs = []
    for h in range(heads):                                  # static unroll, H=4
        e = e_dst_all[:, h:h + 1] + e_src_rows[h:h + 1, :]  # (N, N), edge j->i
        e = jnp.where(e > 0, e, LEAKY_SLOPE * e)            # LeakyReLU(0.2)
        e = e + bias                                        # mask as additive bias
        m = jnp.max(e, axis=-1, keepdims=True)
        p = jnp.exp(e - m)                                  # masked entries underflow to 0
        # With self-loops every row has >=1 unmasked entry so denom >= 1; the guard
        # only protects a hypothetical fully-isolated row (gives uniform attention).
        denom = jnp.maximum(jnp.sum(p, axis=-1, keepdims=True), 1e-20)
        alpha = p / denom                                   # exact softmax divide
        zh = z[:, h * f_out:(h + 1) * f_out]                # (N, f_out)
        outs.append(jnp.dot(alpha, zh, preferred_element_type=jnp.float32))
    return outs


# ----------------------------------------------------------------------------
# Fused forward kernel: conv0 -> ReLU -> conv1 -> edge gather -> EdgeMLP
# ----------------------------------------------------------------------------
def rating_predictor_kernel(
    eli_ref,                                    # (E, 2) int32  (src, dst) per label edge
    x_ref, adj_ref,
    w0_ref, asrc0_ref, adst0_ref, b0_ref,
    w1_ref, asrc1_ref, adst1_ref, b1_ref,
    mw1_ref, mb1_ref, mw2t_ref, mb2_ref,
    out_ref,                                    # (E, rating_out)
):
    x = x_ref[...]                              # (N, Fin)
    N = x_ref.shape[0]
    E, R = out_ref.shape

    # Additive attention-mask bias computed ONCE (replaces 2 selects per head/layer).
    bias = jnp.where(adj_ref[...] > 0.0, 0.0, NEG_INF)      # (N, N)

    H0 = asrc0_ref.shape[0]
    F0 = asrc0_ref.shape[1] // H0
    H1 = asrc1_ref.shape[0]
    F1 = asrc1_ref.shape[1] // H1

    # ---- GATConv layer 0 (concat=True): all heads from one lane-dense matmul ----
    z0 = jnp.dot(x, w0_ref[...], preferred_element_type=jnp.float32)     # (N, H0*F0)
    h0 = jnp.concatenate(
        _gat_attention(z0, asrc0_ref[...], adst0_ref[...], bias, H0, F0),
        axis=-1) + b0_ref[...]                                            # (N, H0*F0)
    h0 = jnp.maximum(h0, 0.0)                   # ReLU; dropout = identity (eval)

    # ---- GATConv layer 1 (concat=False -> mean over heads) ----
    z1 = jnp.dot(h0, w1_ref[...], preferred_element_type=jnp.float32)    # (N, H1*F1)
    heads1 = _gat_attention(z1, asrc1_ref[...], adst1_ref[...], bias, H1, F1)
    node_emb = sum(heads1) * (1.0 / H1) + b1_ref[...]                    # (N, F1)

    # ---- edge gather via one-hot selector matmuls (no dynamic slices, no scratch) ----
    ids = eli_ref[...]                                                   # (E, 2) int32
    iota = lax.broadcasted_iota(jnp.int32, (E, N), 1)                    # (E, N)
    onehot_u = (iota == ids[:, 0:1]).astype(jnp.float32)                 # (E, N)
    onehot_g = (iota == ids[:, 1:2]).astype(jnp.float32)                 # (E, N)
    u = jnp.dot(onehot_u, node_emb, preferred_element_type=jnp.float32)  # (E, F1)
    g = jnp.dot(onehot_g, node_emb, preferred_element_type=jnp.float32)  # (E, F1)
    xcat = jnp.concatenate([u, g], axis=-1)                              # (E, 2*F1)

    # ---- EdgeMLP ----
    hm = jnp.dot(xcat, mw1_ref[...], preferred_element_type=jnp.float32) + mb1_ref[...]
    hm = jnp.maximum(hm, 0.0)                                            # (E, hidden)
    # Final projection (hidden -> rating_out, rating_out tiny): VPU mul + lane reduce
    # instead of a 1-lane MXU push.
    w2t = mw2t_ref[...]                                                  # (R, hidden)
    cols = [jnp.sum(hm * w2t[r:r + 1, :], axis=-1, keepdims=True) for r in range(R)]
    out = cols[0] if R == 1 else jnp.concatenate(cols, axis=-1)
    out_ref[...] = out + mb2_ref[...]


# ----------------------------------------------------------------------------
# Wrapper
# ----------------------------------------------------------------------------
def rating_predictor_forward(params, x, adj, edge_label_index):
    H1, F1 = params['att_src1'].shape
    E = edge_label_index.shape[1]
    rating_out = params['mlp_w2'].shape[1]

    def blk_rows(att):
        # (H, F) -> (H, H*F) block-diagonal: row h holds att[h] in block h.
        H, F = att.shape
        eye = jnp.eye(H, dtype=att.dtype)
        return (eye[:, :, None] * att[None, :, :]).reshape(H, H * F)

    def blk_cols(att):
        # (H, F) -> (H*F, H) block-diagonal: column h holds att[h] in block h.
        H, F = att.shape
        eye = jnp.eye(H, dtype=att.dtype)
        return (att[:, :, None] * eye[:, None, :]).reshape(H * F, H)

    eli_t = edge_label_index.T.astype(jnp.int32)            # (E, 2) lane-resident indices

    inputs = (
        eli_t, x, adj,
        params['w0'], blk_rows(params['att_src0']), blk_cols(params['att_dst0']),
        params['b0'].reshape(1, -1),
        params['w1'], blk_rows(params['att_src1']), blk_cols(params['att_dst1']),
        params['b1'].reshape(1, -1),
        params['mlp_w1'], params['mlp_b1'].reshape(1, -1),
        params['mlp_w2'].T, params['mlp_b2'].reshape(1, -1),
    )

    def full_spec(arr):
        zeros = (0,) * arr.ndim
        return pl.BlockSpec(arr.shape, lambda i, zeros=zeros: zeros)

    grid_spec = pltpu.PrefetchScalarGridSpec(
        num_scalar_prefetch=0,
        grid=(1,),                                   # single fused invocation (toy N)
        in_specs=[full_spec(a) for a in inputs],
        out_specs=pl.BlockSpec((E, rating_out), lambda i: (0, 0)),
    )

    return pl.pallas_call(
        rating_predictor_kernel,
        out_shape=jax.ShapeDtypeStruct((E, rating_out), jnp.float32),
        grid_spec=grid_spec,
        compiler_params=pltpu.CompilerParams(dimension_semantics=("arbitrary",)),
    )(*inputs)


# ----------------------------------------------------------------------------
# Pure-JAX reference (same math, HIGHEST-precision matmuls) for a sanity check.
# ----------------------------------------------------------------------------
def rating_predictor_reference(params, x, adj, edge_label_index):
    mask = adj > 0
    H, F0 = params['att_src0'].shape
    dot = lambda a, b: jnp.dot(a, b, precision=lax.Precision.HIGHEST)

    def gat(z, asrc, adst, heads, fo):
        outs = []
        for h in range(heads):
            zh = z[:, h * fo:(h + 1) * fo]
            e = (jnp.sum(zh * adst[h], -1, keepdims=True)
                 + jnp.sum(zh * asrc[h], -1)[None, :])
            e = jnp.where(e > 0, e, 0.2 * e)
            e = jnp.where(mask, e, -1e30)
            p = jax.nn.softmax(e, axis=-1)
            p = jnp.where(mask, p, 0.0)
            outs.append(dot(p, zh))
        return outs

    z0 = dot(x, params['w0'])
    h0 = jnp.concatenate(gat(z0, params['att_src0'], params['att_dst0'], H, F0),
                         axis=-1) + params['b0']
    h0 = jnp.maximum(h0, 0.0)
    z1 = dot(h0, params['w1'])
    node_emb = sum(gat(z1, params['att_src1'], params['att_dst1'], H,
                       params['att_src1'].shape[1])) / H + params['b1']
    u = node_emb[edge_label_index[0]]
    g = node_emb[edge_label_index[1]]
    xc = jnp.concatenate([u, g], axis=-1)
    hm = jnp.maximum(dot(xc, params['mlp_w1']) + params['mlp_b1'], 0.0)
    return dot(hm, params['mlp_w2']) + params['mlp_b2']


# ----------------------------------------------------------------------------
# Deterministic parameter init (fused-friendly layout: heads along lanes)
# ----------------------------------------------------------------------------
def init_params(key, in_dim, hidden_dim, out_dim, heads, rating_hidden, rating_out):
    ks = jax.random.split(key, 12)

    def p(k, shape, scale=0.1):
        return scale * jax.random.normal(k, shape, jnp.float32)

    return {
        'w0': p(ks[0], (in_dim, heads * hidden_dim)),
        'att_src0': p(ks[1], (heads, hidden_dim)),
        'att_dst0': p(ks[2], (heads, hidden_dim)),
        'b0': p(ks[3], (heads * hidden_dim,)),
        'w1': p(ks[4], (heads * hidden_dim, heads * out_dim)),
        'att_src1': p(ks[5], (heads, out_dim)),
        'att_dst1': p(ks[6], (heads, out_dim)),
        'b1': p(ks[7], (out_dim,)),
        'mlp_w1': p(ks[8], (2 * out_dim, rating_hidden)),
        'mlp_b1': p(ks[9], (rating_hidden,)),
        'mlp_w2': p(ks[10], (rating_hidden, rating_out)),
        'mlp_b2': p(ks[11], (rating_out,)),
    }


if __name__ == "__main__":
    # Small shapes consistent with the module
    N = 16            # number of graph nodes
    IN_DIM = 16
    HIDDEN = 8
    OUT_DIM = 16
    HEADS = 4
    RATING_HIDDEN = 64
    RATING_OUT = 1
    NUM_EDGES = 48
    NUM_LABEL_EDGES = 8

    key = jax.random.PRNGKey(0)
    k_x, k_e, k_l, k_p = jax.random.split(key, 4)

    # Node features
    x = jax.random.normal(k_x, (N, IN_DIM), jnp.float32)

    # Deterministic unique directed edges (no self loops; GAT adds them itself)
    pairs = [(i, j) for i in range(N) for j in range(N) if i != j]
    perm = jax.random.permutation(k_e, len(pairs))
    sel = [pairs[int(t)] for t in perm[:NUM_EDGES]]
    src = jnp.array([s for s, _ in sel], jnp.int32)
    dst = jnp.array([d for _, d in sel], jnp.int32)

    # Dense adjacency mask: adj[target, source] = 1, plus self loops
    adj = jnp.zeros((N, N), jnp.float32).at[dst, src].set(1.0)
    adj = jnp.maximum(adj, jnp.eye(N, dtype=jnp.float32))

    # Edge-label pairs (user, game) to predict ratings for
    perm_l = jax.random.permutation(k_l, N)
    lbl_src = perm_l[:NUM_LABEL_EDGES].astype(jnp.int32)
    lbl_dst = jnp.flip(perm_l)[:NUM_LABEL_EDGES].astype(jnp.int32)
    edge_label_index = jnp.stack([lbl_src, lbl_dst])      # (2, NUM_LABEL_EDGES)

    params = init_params(k_p, IN_DIM, HIDDEN, OUT_DIM, HEADS, RATING_HIDDEN, RATING_OUT)

    rating_pred = rating_predictor_forward(params, x, adj, edge_label_index)
    rating_pred = jax.block_until_ready(rating_pred)

    assert rating_pred.shape == (NUM_LABEL_EDGES, RATING_OUT)
    assert bool(jnp.all(jnp.isfinite(rating_pred)))

    # Sanity check against the pure-JAX reference.  Softmax is now an exact divide;
    # remaining tolerance only covers f32 MXU pass-count differences vs. HIGHEST.
    ref = rating_predictor_reference(params, x, adj, edge_label_index)
    assert bool(jnp.allclose(rating_pred, ref, atol=5e-3, rtol=5e-3))

    print("KERNEL_OK")
</pallas_src>

<mosaic_0001>
module attributes {stable_mosaic.version = 11 : i64} {
  func.func @rating_predictor_kernel(%arg0: i32, %arg1: memref<8x2xi32, #tpu.memory_space<vmem>>, %arg2: memref<16x16xf32, #tpu.memory_space<vmem>>, %arg3: memref<16x16xf32, #tpu.memory_space<vmem>>, %arg4: memref<16x32xf32, #tpu.memory_space<vmem>>, %arg5: memref<4x32xf32, #tpu.memory_space<vmem>>, %arg6: memref<32x4xf32, #tpu.memory_space<vmem>>, %arg7: memref<1x32xf32, #tpu.memory_space<vmem>>, %arg8: memref<32x64xf32, #tpu.memory_space<vmem>>, %arg9: memref<4x64xf32, #tpu.memory_space<vmem>>, %arg10: memref<64x4xf32, #tpu.memory_space<vmem>>, %arg11: memref<1x16xf32, #tpu.memory_space<vmem>>, %arg12: memref<32x64xf32, #tpu.memory_space<vmem>>, %arg13: memref<1x64xf32, #tpu.memory_space<vmem>>, %arg14: memref<1x64xf32, #tpu.memory_space<vmem>>, %arg15: memref<1x1xf32, #tpu.memory_space<vmem>>, %arg16: memref<8x1xf32, #tpu.memory_space<vmem>>) attributes {dimension_semantics = [#tpu.dimension_semantics<arbitrary>], iteration_bounds = array<i64: 1>, scalar_prefetch = 0 : i64, scratch_operands = 0 : i64, tpu.core_type = #tpu.core_type<tc>, window_params = [{pipeline_mode = #tpu.pipeline_mode<synchronous>, transform_indices = @transform_0, window_bounds = array<i64: 8, 2>}, {pipeline_mode = #tpu.pipeline_mode<synchronous>, transform_indices = @transform_1, window_bounds = array<i64: 16, 16>}, {pipeline_mode = #tpu.pipeline_mode<synchronous>, transform_indices = @transform_2, window_bounds = array<i64: 16, 16>}, {pipeline_mode = #tpu.pipeline_mode<synchronous>, transform_indices = @transform_3, window_bounds = array<i64: 16, 32>}, {pipeline_mode = #tpu.pipeline_mode<synchronous>, transform_indices = @transform_4, window_bounds = array<i64: 4, 32>}, {pipeline_mode = #tpu.pipeline_mode<synchronous>, transform_indices = @transform_5, window_bounds = array<i64: 32, 4>}, {pipeline_mode = #tpu.pipeline_mode<synchronous>, transform_indices = @transform_6, window_bounds = array<i64: 1, 32>}, {pipeline_mode = #tpu.pipeline_mode<synchronous>, transform_indices = @transform_7, window_bounds = array<i64: 32, 64>}, {pipeline_mode = #tpu.pipeline_mode<synchronous>, transform_indices = @transform_8, window_bounds = array<i64: 4, 64>}, {pipeline_mode = #tpu.pipeline_mode<synchronous>, transform_indices = @transform_9, window_bounds = array<i64: 64, 4>}, {pipeline_mode = #tpu.pipeline_mode<synchronous>, transform_indices = @transform_10, window_bounds = array<i64: 1, 16>}, {pipeline_mode = #tpu.pipeline_mode<synchronous>, transform_indices = @transform_11, window_bounds = array<i64: 32, 64>}, {pipeline_mode = #tpu.pipeline_mode<synchronous>, transform_indices = @transform_12, window_bounds = array<i64: 1, 64>}, {pipeline_mode = #tpu.pipeline_mode<synchronous>, transform_indices = @transform_13, window_bounds = array<i64: 1, 64>}, {pipeline_mode = #tpu.pipeline_mode<synchronous>, transform_indices = @transform_14, window_bounds = array<i64: 1, 1>}, {pipeline_mode = #tpu.pipeline_mode<synchronous>, transform_indices = @transform_15, window_bounds = array<i64: 8, 1>}]} {
    %c0 = arith.constant 0 : index
    %c0_0 = arith.constant 0 : index
    %0 = vector.load %arg2[%c0, %c0_0] : memref<16x16xf32, #tpu.memory_space<vmem>>, vector<16x16xf32>
    %c0_1 = arith.constant 0 : index
    %c0_2 = arith.constant 0 : index
    %1 = vector.load %arg3[%c0_1, %c0_2] : memref<16x16xf32, #tpu.memory_space<vmem>>, vector<16x16xf32>
    %cst = arith.constant 0.000000e+00 : f32
    %2 = vector.broadcast %cst : f32 to vector<16x16xf32>
    %3 = arith.cmpf ogt, %1, %2 : vector<16x16xf32>
    %cst_3 = arith.constant 0.000000e+00 : f32
    %cst_4 = arith.constant -1.000000e+30 : f32
    %4 = vector.broadcast %cst_3 : f32 to vector<16x16xf32>
    %5 = vector.broadcast %cst_4 : f32 to vector<16x16xf32>
    %6 = arith.select %3, %4, %5 : vector<16x16xi1>, vector<16x16xf32>
    %c0_5 = arith.constant 0 : index
    %c0_6 = arith.constant 0 : index
    %7 = vector.load %arg4[%c0_5, %c0_6] : memref<16x32xf32, #tpu.memory_space<vmem>>, vector<16x32xf32>
    %cst_7 = arith.constant dense<0.000000e+00> : vector<16x32xf32>
    %8 = tpu.matmul %0, %7, %cst_7 {dimension_numbers = #tpu.dot_dimension_numbers<[1], [0], [0], [1], [0, 0, 1, 1], [], []>} : vector<16x16xf32>, vector<16x32xf32>, vector<16x32xf32> -> vector<16x32xf32>
    %c0_8 = arith.constant 0 : index
    %c0_9 = arith.constant 0 : index
    %9 = vector.load %arg5[%c0_8, %c0_9] : memref<4x32xf32, #tpu.memory_space<vmem>>, vector<4x32xf32>
    %c0_10 = arith.constant 0 : index
    %c0_11 = arith.constant 0 : index
    %10 = vector.load %arg6[%c0_10, %c0_11] : memref<32x4xf32, #tpu.memory_space<vmem>>, vector<32x4xf32>
    %cst_12 = arith.constant dense<0.000000e+00> : vector<16x4xf32>
    %11 = tpu.matmul %8, %10, %cst_12 {dimension_numbers = #tpu.dot_dimension_numbers<[1], [0], [0], [1], [0, 0, 1, 1], [], []>} : vector<16x32xf32>, vector<32x4xf32>, vector<16x4xf32> -> vector<16x4xf32>
    "tpu.trace_start"() <{level = 10 : i32, message = "hf,nf->hn"}> : () -> ()
    %cst_13 = arith.constant dense<0.000000e+00> : vector<4x16xf32>
    %12 = tpu.matmul %9, %8, %cst_13 {dimension_numbers = #tpu.dot_dimension_numbers<[1], [1], [0], [0], [0, 0, 1, 0], [], []>} : vector<4x32xf32>, vector<16x32xf32>, vector<4x16xf32> -> vector<4x16xf32>
    "tpu.trace_stop"() : () -> ()
    %13 = vector.extract_strided_slice %11 {offsets = [0, 0], sizes = [16, 1], strides = [1, 1]} : vector<16x4xf32> to vector<16x1xf32>
    %14 = vector.extract_strided_slice %12 {offsets = [0, 0], sizes = [1, 16], strides = [1, 1]} : vector<4x16xf32> to vector<1x16xf32>
    %15 = vector.broadcast %13 : vector<16x1xf32> to vector<16x16xf32>
    %16 = vector.broadcast %14 : vector<1x16xf32> to vector<16x16xf32>
    %17 = arith.addf %15, %16 : vector<16x16xf32>
    %cst_14 = arith.constant 0.000000e+00 : f32
    %18 = vector.broadcast %cst_14 : f32 to vector<16x16xf32>
    %19 = arith.cmpf ogt, %17, %18 : vector<16x16xf32>
    %cst_15 = arith.constant 2.000000e-01 : f32
    %20 = vector.broadcast %cst_15 : f32 to vector<16x16xf32>
    %21 = arith.mulf %20, %17 : vector<16x16xf32>
    %22 = arith.select %19, %17, %21 : vector<16x16xi1>, vector<16x16xf32>
    %23 = arith.addf %22, %6 : vector<16x16xf32>
    %cst_16 = arith.constant dense<0xFF800000> : vector<16xf32>
    %24 = vector.multi_reduction <maximumf>, %23, %cst_16 [1] : vector<16x16xf32> to vector<16xf32>
    %25 = vector.shape_cast %24 : vector<16xf32> to vector<16x1xf32>
    %26 = vector.broadcast %25 : vector<16x1xf32> to vector<16x16xf32>
    %27 = arith.subf %23, %26 : vector<16x16xf32>
    %28 = math.exp %27 : vector<16x16xf32>
    %cst_17 = arith.constant dense<0.000000e+00> : vector<16xf32>
    %29 = vector.multi_reduction <add>, %28, %cst_17 [1] : vector<16x16xf32> to vector<16xf32>
    %30 = vector.shape_cast %29 : vector<16xf32> to vector<16x1xf32>
    %cst_18 = arith.constant 9.99999968E-21 : f32
    %31 = vector.broadcast %cst_18 : f32 to vector<16x1xf32>
    %32 = arith.maximumf %30, %31 : vector<16x1xf32>
    %33 = vector.broadcast %32 : vector<16x1xf32> to vector<16x16xf32>
    %34 = arith.divf %28, %33 : vector<16x16xf32>
    %35 = vector.extract_strided_slice %8 {offsets = [0, 0], sizes = [16, 8], strides = [1, 1]} : vector<16x32xf32> to vector<16x8xf32>
    %cst_19 = arith.constant dense<0.000000e+00> : vector<16x8xf32>
    %36 = tpu.matmul %34, %35, %cst_19 {dimension_numbers = #tpu.dot_dimension_numbers<[1], [0], [0], [1], [0, 0, 1, 1], [], []>} : vector<16x16xf32>, vector<16x8xf32>, vector<16x8xf32> -> vector<16x8xf32>
    %37 = vector.extract_strided_slice %11 {offsets = [0, 1], sizes = [16, 1], strides = [1, 1]} : vector<16x4xf32> to vector<16x1xf32>
    %38 = vector.extract_strided_slice %12 {offsets = [1, 0], sizes = [1, 16], strides = [1, 1]} : vector<4x16xf32> to vector<1x16xf32>
    %39 = vector.broadcast %37 : vector<16x1xf32> to vector<16x16xf32>
    %40 = vector.broadcast %38 : vector<1x16xf32> to vector<16x16xf32>
    %41 = arith.addf %39, %40 : vector<16x16xf32>
    %cst_20 = arith.constant 0.000000e+00 : f32
    %42 = vector.broadcast %cst_20 : f32 to vector<16x16xf32>
    %43 = arith.cmpf ogt, %41, %42 : vector<16x16xf32>
    %cst_21 = arith.constant 2.000000e-01 : f32
    %44 = vector.broadcast %cst_21 : f32 to vector<16x16xf32>
    %45 = arith.mulf %44, %41 : vector<16x16xf32>
    %46 = arith.select %43, %41, %45 : vector<16x16xi1>, vector<16x16xf32>
    %47 = arith.addf %46, %6 : vector<16x16xf32>
    %cst_22 = arith.constant dense<0xFF800000> : vector<16xf32>
    %48 = vector.multi_reduction <maximumf>, %47, %cst_22 [1] : vector<16x16xf32> to vector<16xf32>
    %49 = vector.shape_cast %48 : vector<16xf32> to vector<16x1xf32>
    %50 = vector.broadcast %49 : vector<16x1xf32> to vector<16x16xf32>
    %51 = arith.subf %47, %50 : vector<16x16xf32>
    %52 = math.exp %51 : vector<16x16xf32>
    %cst_23 = arith.constant dense<0.000000e+00> : vector<16xf32>
    %53 = vector.multi_reduction <add>, %52, %cst_23 [1] : vector<16x16xf32> to vector<16xf32>
    %54 = vector.shape_cast %53 : vector<16xf32> to vector<16x1xf32>
    %cst_24 = arith.constant 9.99999968E-21 : f32
    %55 = vector.broadcast %cst_24 : f32 to vector<16x1xf32>
    %56 = arith.maximumf %54, %55 : vector<16x1xf32>
    %57 = vector.broadcast %56 : vector<16x1xf32> to vector<16x16xf32>
    %58 = arith.divf %52, %57 : vector<16x16xf32>
    %59 = vector.extract_strided_slice %8 {offsets = [0, 8], sizes = [16, 8], strides = [1, 1]} : vector<16x32xf32> to vector<16x8xf32>
    %cst_25 = arith.constant dense<0.000000e+00> : vector<16x8xf32>
    %60 = tpu.matmul %58, %59, %cst_25 {dimension_numbers = #tpu.dot_dimension_numbers<[1], [0], [0], [1], [0, 0, 1, 1], [], []>} : vector<16x16xf32>, vector<16x8xf32>, vector<16x8xf32> -> vector<16x8xf32>
    %61 = vector.extract_strided_slice %11 {offsets = [0, 2], sizes = [16, 1], strides = [1, 1]} : vector<16x4xf32> to vector<16x1xf32>
    %62 = vector.extract_strided_slice %12 {offsets = [2, 0], sizes = [1, 16], strides = [1, 1]} : vector<4x16xf32> to vector<1x16xf32>
    %63 = vector.broadcast %61 : vector<16x1xf32> to vector<16x16xf32>
    %64 = vector.broadcast %62 : vector<1x16xf32> to vector<16x16xf32>
    %65 = arith.addf %63, %64 : vector<16x16xf32>
    %cst_26 = arith.constant 0.000000e+00 : f32
    %66 = vector.broadcast %cst_26 : f32 to vector<16x16xf32>
    %67 = arith.cmpf ogt, %65, %66 : vector<16x16xf32>
    %cst_27 = arith.constant 2.000000e-01 : f32
    %68 = vector.broadcast %cst_27 : f32 to vector<16x16xf32>
    %69 = arith.mulf %68, %65 : vector<16x16xf32>
    %70 = arith.select %67, %65, %69 : vector<16x16xi1>, vector<16x16xf32>
    %71 = arith.addf %70, %6 : vector<16x16xf32>
    %cst_28 = arith.constant dense<0xFF800000> : vector<16xf32>
    %72 = vector.multi_reduction <maximumf>, %71, %cst_28 [1] : vector<16x16xf32> to vector<16xf32>
    %73 = vector.shape_cast %72 : vector<16xf32> to vector<16x1xf32>
    %74 = vector.broadcast %73 : vector<16x1xf32> to vector<16x16xf32>
    %75 = arith.subf %71, %74 : vector<16x16xf32>
    %76 = math.exp %75 : vector<16x16xf32>
    %cst_29 = arith.constant dense<0.000000e+00> : vector<16xf32>
    %77 = vector.multi_reduction <add>, %76, %cst_29 [1] : vector<16x16xf32> to vector<16xf32>
    %78 = vector.shape_cast %77 : vector<16xf32> to vector<16x1xf32>
    %cst_30 = arith.constant 9.99999968E-21 : f32
    %79 = vector.broadcast %cst_30 : f32 to vector<16x1xf32>
    %80 = arith.maximumf %78, %79 : vector<16x1xf32>
    %81 = vector.broadcast %80 : vector<16x1xf32> to vector<16x16xf32>
    %82 = arith.divf %76, %81 : vector<16x16xf32>
    %83 = vector.extract_strided_slice %8 {offsets = [0, 16], sizes = [16, 8], strides = [1, 1]} : vector<16x32xf32> to vector<16x8xf32>
    %cst_31 = arith.constant dense<0.000000e+00> : vector<16x8xf32>
    %84 = tpu.matmul %82, %83, %cst_31 {dimension_numbers = #tpu.dot_dimension_numbers<[1], [0], [0], [1], [0, 0, 1, 1], [], []>} : vector<16x16xf32>, vector<16x8xf32>, vector<16x8xf32> -> vector<16x8xf32>
    %85 = vector.extract_strided_slice %11 {offsets = [0, 3], sizes = [16, 1], strides = [1, 1]} : vector<16x4xf32> to vector<16x1xf32>
    %86 = vector.extract_strided_slice %12 {offsets = [3, 0], sizes = [1, 16], strides = [1, 1]} : vector<4x16xf32> to vector<1x16xf32>
    %87 = vector.broadcast %85 : vector<16x1xf32> to vector<16x16xf32>
    %88 = vector.broadcast %86 : vector<1x16xf32> to vector<16x16xf32>
    %89 = arith.addf %87, %88 : vector<16x16xf32>
    %cst_32 = arith.constant 0.000000e+00 : f32
    %90 = vector.broadcast %cst_32 : f32 to vector<16x16xf32>
    %91 = arith.cmpf ogt, %89, %90 : vector<16x16xf32>
    %cst_33 = arith.constant 2.000000e-01 : f32
    %92 = vector.broadcast %cst_33 : f32 to vector<16x16xf32>
    %93 = arith.mulf %92, %89 : vector<16x16xf32>
    %94 = arith.select %91, %89, %93 : vector<16x16xi1>, vector<16x16xf32>
    %95 = arith.addf %94, %6 : vector<16x16xf32>
    %cst_34 = arith.constant dense<0xFF800000> : vector<16xf32>
    %96 = vector.multi_reduction <maximumf>, %95, %cst_34 [1] : vector<16x16xf32> to vector<16xf32>
    %97 = vector.shape_cast %96 : vector<16xf32> to vector<16x1xf32>
    %98 = vector.broadcast %97 : vector<16x1xf32> to vector<16x16xf32>
    %99 = arith.subf %95, %98 : vector<16x16xf32>
    %100 = math.exp %99 : vector<16x16xf32>
    %cst_35 = arith.constant dense<0.000000e+00> : vector<16xf32>
    %101 = vector.multi_reduction <add>, %100, %cst_35 [1] : vector<16x16xf32> to vector<16xf32>
    %102 = vector.shape_cast %101 : vector<16xf32> to vector<16x1xf32>
    %cst_36 = arith.constant 9.99999968E-21 : f32
    %103 = vector.broadcast %cst_36 : f32 to vector<16x1xf32>
    %104 = arith.maximumf %102, %103 : vector<16x1xf32>
    %105 = vector.broadcast %104 : vector<16x1xf32> to vector<16x16xf32>
    %106 = arith.divf %100, %105 : vector<16x16xf32>
    %107 = vector.extract_strided_slice %8 {offsets = [0, 24], sizes = [16, 8], strides = [1, 1]} : vector<16x32xf32> to vector<16x8xf32>
    %cst_37 = arith.constant dense<0.000000e+00> : vector<16x8xf32>
    %108 = tpu.matmul %106, %107, %cst_37 {dimension_numbers = #tpu.dot_dimension_numbers<[1], [0], [0], [1], [0, 0, 1, 1], [], []>} : vector<16x16xf32>, vector<16x8xf32>, vector<16x8xf32> -> vector<16x8xf32>
    %109 = tpu.concatenate %36, %60, %84, %108 in 1 : vector<16x8xf32>, vector<16x8xf32>, vector<16x8xf32>, vector<16x8xf32> -> vector<16x32xf32>
    %c0_38 = arith.constant 0 : index
    %c0_39 = arith.constant 0 : index
    %110 = vector.load %arg7[%c0_38, %c0_39] : memref<1x32xf32, #tpu.memory_space<vmem>>, vector<1x32xf32>
    %111 = vector.broadcast %110 : vector<1x32xf32> to vector<16x32xf32>
    %112 = arith.addf %109, %111 : vector<16x32xf32>
    %cst_40 = arith.constant 0.000000e+00 : f32
    %113 = vector.broadcast %cst_40 : f32 to vector<16x32xf32>
    %114 = arith.maximumf %112, %113 : vector<16x32xf32>
    %c0_41 = arith.constant 0 : index
    %c0_42 = arith.constant 0 : index
    %115 = vector.load %arg8[%c0_41, %c0_42] : memref<32x64xf32, #tpu.memory_space<vmem>>, vector<32x64xf32>
    %cst_43 = arith.constant dense<0.000000e+00> : vector<16x64xf32>
    %116 = tpu.matmul %114, %115, %cst_43 {dimension_numbers = #tpu.dot_dimension_numbers<[1], [0], [0], [1], [0, 0, 1, 1], [], []>} : vector<16x32xf32>, vector<32x64xf32>, vector<16x64xf32> -> vector<16x64xf32>
    %c0_44 = arith.constant 0 : index
    %c0_45 = arith.constant 0 : index
    %117 = vector.load %arg9[%c0_44, %c0_45] : memref<4x64xf32, #tpu.memory_space<vmem>>, vector<4x64xf32>
    %c0_46 = arith.constant 0 : index
    %c0_47 = arith.constant 0 : index
    %118 = vector.load %arg10[%c0_46, %c0_47] : memref<64x4xf32, #tpu.memory_space<vmem>>, vector<64x4xf32>
    %cst_48 = arith.constant dense<0.000000e+00> : vector<16x4xf32>
    %119 = tpu.matmul %116, %118, %cst_48 {dimension_numbers = #tpu.dot_dimension_numbers<[1], [0], [0], [1], [0, 0, 1, 1], [], []>} : vector<16x64xf32>, vector<64x4xf32>, vector<16x4xf32> -> vector<16x4xf32>
    "tpu.trace_start"() <{level = 10 : i32, message = "hf,nf->hn"}> : () -> ()
    %cst_49 = arith.constant dense<0.000000e+00> : vector<4x16xf32>
    %120 = tpu.matmul %117, %116, %cst_49 {dimension_numbers = #tpu.dot_dimension_numbers<[1], [1], [0], [0], [0, 0, 1, 0], [], []>} : vector<4x64xf32>, vector<16x64xf32>, vector<4x16xf32> -> vector<4x16xf32>
    "tpu.trace_stop"() : () -> ()
    %121 = vector.extract_strided_slice %119 {offsets = [0, 0], sizes = [16, 1], strides = [1, 1]} : vector<16x4xf32> to vector<16x1xf32>
    %122 = vector.extract_strided_slice %120 {offsets = [0, 0], sizes = [1, 16], strides = [1, 1]} : vector<4x16xf32> to vector<1x16xf32>
    %123 = vector.broadcast %121 : vector<16x1xf32> to vector<16x16xf32>
    %124 = vector.broadcast %122 : vector<1x16xf32> to vector<16x16xf32>
    %125 = arith.addf %123, %124 : vector<16x16xf32>
    %cst_50 = arith.constant 0.000000e+00 : f32
    %126 = vector.broadcast %cst_50 : f32 to vector<16x16xf32>
    %127 = arith.cmpf ogt, %125, %126 : vector<16x16xf32>
    %cst_51 = arith.constant 2.000000e-01 : f32
    %128 = vector.broadcast %cst_51 : f32 to vector<16x16xf32>
    %129 = arith.mulf %128, %125 : vector<16x16xf32>
    %130 = arith.select %127, %125, %129 : vector<16x16xi1>, vector<16x16xf32>
    %131 = arith.addf %130, %6 : vector<16x16xf32>
    %cst_52 = arith.constant dense<0xFF800000> : vector<16xf32>
    %132 = vector.multi_reduction <maximumf>, %131, %cst_52 [1] : vector<16x16xf32> to vector<16xf32>
    %133 = vector.shape_cast %132 : vector<16xf32> to vector<16x1xf32>
    %134 = vector.broadcast %133 : vector<16x1xf32> to vector<16x16xf32>
    %135 = arith.subf %131, %134 : vector<16x16xf32>
    %136 = math.exp %135 : vector<16x16xf32>
    %cst_53 = arith.constant dense<0.000000e+00> : vector<16xf32>
    %137 = vector.multi_reduction <add>, %136, %cst_53 [1] : vector<16x16xf32> to vector<16xf32>
    %138 = vector.shape_cast %137 : vector<16xf32> to vector<16x1xf32>
    %cst_54 = arith.constant 9.99999968E-21 : f32
    %139 = vector.broadcast %cst_54 : f32 to vector<16x1xf32>
    %140 = arith.maximumf %138, %139 : vector<16x1xf32>
    %141 = vector.broadcast %140 : vector<16x1xf32> to vector<16x16xf32>
    %142 = arith.divf %136, %141 : vector<16x16xf32>
    %143 = vector.extract_strided_slice %116 {offsets = [0, 0], sizes = [16, 16], strides = [1, 1]} : vector<16x64xf32> to vector<16x16xf32>
    %cst_55 = arith.constant dense<0.000000e+00> : vector<16x16xf32>
    %144 = tpu.matmul %142, %143, %cst_55 {dimension_numbers = #tpu.dot_dimension_numbers<[1], [0], [0], [1], [0, 0, 1, 1], [], []>} : vector<16x16xf32>, vector<16x16xf32>, vector<16x16xf32> -> vector<16x16xf32>
    %145 = vector.extract_strided_slice %119 {offsets = [0, 1], sizes = [16, 1], strides = [1, 1]} : vector<16x4xf32> to vector<16x1xf32>
    %146 = vector.extract_strided_slice %120 {offsets = [1, 0], sizes = [1, 16], strides = [1, 1]} : vector<4x16xf32> to vector<1x16xf32>
    %147 = vector.broadcast %145 : vector<16x1xf32> to vector<16x16xf32>
    %148 = vector.broadcast %146 : vector<1x16xf32> to vector<16x16xf32>
    %149 = arith.addf %147, %148 : vector<16x16xf32>
    %cst_56 = arith.constant 0.000000e+00 : f32
    %150 = vector.broadcast %cst_56 : f32 to vector<16x16xf32>
    %151 = arith.cmpf ogt, %149, %150 : vector<16x16xf32>
    %cst_57 = arith.constant 2.000000e-01 : f32
    %152 = vector.broadcast %cst_57 : f32 to vector<16x16xf32>
    %153 = arith.mulf %152, %149 : vector<16x16xf32>
    %154 = arith.select %151, %149, %153 : vector<16x16xi1>, vector<16x16xf32>
    %155 = arith.addf %154, %6 : vector<16x16xf32>
    %cst_58 = arith.constant dense<0xFF800000> : vector<16xf32>
    %156 = vector.multi_reduction <maximumf>, %155, %cst_58 [1] : vector<16x16xf32> to vector<16xf32>
    %157 = vector.shape_cast %156 : vector<16xf32> to vector<16x1xf32>
    %158 = vector.broadcast %157 : vector<16x1xf32> to vector<16x16xf32>
    %159 = arith.subf %155, %158 : vector<16x16xf32>
    %160 = math.exp %159 : vector<16x16xf32>
    %cst_59 = arith.constant dense<0.000000e+00> : vector<16xf32>
    %161 = vector.multi_reduction <add>, %160, %cst_59 [1] : vector<16x16xf32> to vector<16xf32>
    %162 = vector.shape_cast %161 : vector<16xf32> to vector<16x1xf32>
    %cst_60 = arith.constant 9.99999968E-21 : f32
    %163 = vector.broadcast %cst_60 : f32 to vector<16x1xf32>
    %164 = arith.maximumf %162, %163 : vector<16x1xf32>
    %165 = vector.broadcast %164 : vector<16x1xf32> to vector<16x16xf32>
    %166 = arith.divf %160, %165 : vector<16x16xf32>
    %167 = vector.extract_strided_slice %116 {offsets = [0, 16], sizes = [16, 16], strides = [1, 1]} : vector<16x64xf32> to vector<16x16xf32>
    %cst_61 = arith.constant dense<0.000000e+00> : vector<16x16xf32>
    %168 = tpu.matmul %166, %167, %cst_61 {dimension_numbers = #tpu.dot_dimension_numbers<[1], [0], [0], [1], [0, 0, 1, 1], [], []>} : vector<16x16xf32>, vector<16x16xf32>, vector<16x16xf32> -> vector<16x16xf32>
    %169 = vector.extract_strided_slice %119 {offsets = [0, 2], sizes = [16, 1], strides = [1, 1]} : vector<16x4xf32> to vector<16x1xf32>
    %170 = vector.extract_strided_slice %120 {offsets = [2, 0], sizes = [1, 16], strides = [1, 1]} : vector<4x16xf32> to vector<1x16xf32>
    %171 = vector.broadcast %169 : vector<16x1xf32> to vector<16x16xf32>
    %172 = vector.broadcast %170 : vector<1x16xf32> to vector<16x16xf32>
    %173 = arith.addf %171, %172 : vector<16x16xf32>
    %cst_62 = arith.constant 0.000000e+00 : f32
    %174 = vector.broadcast %cst_62 : f32 to vector<16x16xf32>
    %175 = arith.cmpf ogt, %173, %174 : vector<16x16xf32>
    %cst_63 = arith.constant 2.000000e-01 : f32
    %176 = vector.broadcast %cst_63 : f32 to vector<16x16xf32>
    %177 = arith.mulf %176, %173 : vector<16x16xf32>
    %178 = arith.select %175, %173, %177 : vector<16x16xi1>, vector<16x16xf32>
    %179 = arith.addf %178, %6 : vector<16x16xf32>
    %cst_64 = arith.constant dense<0xFF800000> : vector<16xf32>
    %180 = vector.multi_reduction <maximumf>, %179, %cst_64 [1] : vector<16x16xf32> to vector<16xf32>
    %181 = vector.shape_cast %180 : vector<16xf32> to vector<16x1xf32>
    %182 = vector.broadcast %181 : vector<16x1xf32> to vector<16x16xf32>
    %183 = arith.subf %179, %182 : vector<16x16xf32>
    %184 = math.exp %183 : vector<16x16xf32>
    %cst_65 = arith.constant dense<0.000000e+00> : vector<16xf32>
    %185 = vector.multi_reduction <add>, %184, %cst_65 [1] : vector<16x16xf32> to vector<16xf32>
    %186 = vector.shape_cast %185 : vector<16xf32> to vector<16x1xf32>
    %cst_66 = arith.constant 9.99999968E-21 : f32
    %187 = vector.broadcast %cst_66 : f32 to vector<16x1xf32>
    %188 = arith.maximumf %186, %187 : vector<16x1xf32>
    %189 = vector.broadcast %188 : vector<16x1xf32> to vector<16x16xf32>
    %190 = arith.divf %184, %189 : vector<16x16xf32>
    %191 = vector.extract_strided_slice %116 {offsets = [0, 32], sizes = [16, 16], strides = [1, 1]} : vector<16x64xf32> to vector<16x16xf32>
    %cst_67 = arith.constant dense<0.000000e+00> : vector<16x16xf32>
    %192 = tpu.matmul %190, %191, %cst_67 {dimension_numbers = #tpu.dot_dimension_numbers<[1], [0], [0], [1], [0, 0, 1, 1], [], []>} : vector<16x16xf32>, vector<16x16xf32>, vector<16x16xf32> -> vector<16x16xf32>
    %193 = vector.extract_strided_slice %119 {offsets = [0, 3], sizes = [16, 1], strides = [1, 1]} : vector<16x4xf32> to vector<16x1xf32>
    %194 = vector.extract_strided_slice %120 {offsets = [3, 0], sizes = [1, 16], strides = [1, 1]} : vector<4x16xf32> to vector<1x16xf32>
    %195 = vector.broadcast %193 : vector<16x1xf32> to vector<16x16xf32>
    %196 = vector.broadcast %194 : vector<1x16xf32> to vector<16x16xf32>
    %197 = arith.addf %195, %196 : vector<16x16xf32>
    %cst_68 = arith.constant 0.000000e+00 : f32
    %198 = vector.broadcast %cst_68 : f32 to vector<16x16xf32>
    %199 = arith.cmpf ogt, %197, %198 : vector<16x16xf32>
    %cst_69 = arith.constant 2.000000e-01 : f32
    %200 = vector.broadcast %cst_69 : f32 to vector<16x16xf32>
    %201 = arith.mulf %200, %197 : vector<16x16xf32>
    %202 = arith.select %199, %197, %201 : vector<16x16xi1>, vector<16x16xf32>
    %203 = arith.addf %202, %6 : vector<16x16xf32>
    %cst_70 = arith.constant dense<0xFF800000> : vector<16xf32>
    %204 = vector.multi_reduction <maximumf>, %203, %cst_70 [1] : vector<16x16xf32> to vector<16xf32>
    %205 = vector.shape_cast %204 : vector<16xf32> to vector<16x1xf32>
    %206 = vector.broadcast %205 : vector<16x1xf32> to vector<16x16xf32>
    %207 = arith.subf %203, %206 : vector<16x16xf32>
    %208 = math.exp %207 : vector<16x16xf32>
    %cst_71 = arith.constant dense<0.000000e+00> : vector<16xf32>
    %209 = vector.multi_reduction <add>, %208, %cst_71 [1] : vector<16x16xf32> to vector<16xf32>
    %210 = vector.shape_cast %209 : vector<16xf32> to vector<16x1xf32>
    %cst_72 = arith.constant 9.99999968E-21 : f32
    %211 = vector.broadcast %cst_72 : f32 to vector<16x1xf32>
    %212 = arith.maximumf %210, %211 : vector<16x1xf32>
    %213 = vector.broadcast %212 : vector<16x1xf32> to vector<16x16xf32>
    %214 = arith.divf %208, %213 : vector<16x16xf32>
    %215 = vector.extract_strided_slice %116 {offsets = [0, 48], sizes = [16, 16], strides = [1, 1]} : vector<16x64xf32> to vector<16x16xf32>
    %cst_73 = arith.constant dense<0.000000e+00> : vector<16x16xf32>
    %216 = tpu.matmul %214, %215, %cst_73 {dimension_numbers = #tpu.dot_dimension_numbers<[1], [0], [0], [1], [0, 0, 1, 1], [], []>} : vector<16x16xf32>, vector<16x16xf32>, vector<16x16xf32> -> vector<16x16xf32>
    %cst_74 = arith.constant 0.000000e+00 : f32
    %217 = vector.broadcast %cst_74 : f32 to vector<16x16xf32>
    %218 = arith.addf %217, %144 : vector<16x16xf32>
    %219 = arith.addf %218, %168 : vector<16x16xf32>
    %220 = arith.addf %219, %192 : vector<16x16xf32>
    %221 = arith.addf %220, %216 : vector<16x16xf32>
    %cst_75 = arith.constant 2.500000e-01 : f32
    %222 = vector.broadcast %cst_75 : f32 to vector<16x16xf32>
    %223 = arith.mulf %221, %222 : vector<16x16xf32>
    %c0_76 = arith.constant 0 : index
    %c0_77 = arith.constant 0 : index
    %224 = vector.load %arg11[%c0_76, %c0_77] : memref<1x16xf32, #tpu.memory_space<vmem>>, vector<1x16xf32>
    %225 = vector.broadcast %224 : vector<1x16xf32> to vector<16x16xf32>
    %226 = arith.addf %223, %225 : vector<16x16xf32>
    %c0_78 = arith.constant 0 : index
    %c0_79 = arith.constant 0 : index
    %227 = vector.load %arg1[%c0_78, %c0_79] : memref<8x2xi32, #tpu.memory_space<vmem>>, vector<8x2xi32>
    %228 = tpu.iota {dimensions = array<i32: 1>} : vector<8x16xi32>
    %229 = vector.extract_strided_slice %227 {offsets = [0, 0], sizes = [8, 1], strides = [1, 1]} : vector<8x2xi32> to vector<8x1xi32>
    %230 = vector.broadcast %229 : vector<8x1xi32> to vector<8x16xi32>
    %231 = arith.cmpi eq, %228, %230 : vector<8x16xi32>
    %232 = arith.extui %231 : vector<8x16xi1> to vector<8x16xi32>
    %233 = arith.sitofp %232 : vector<8x16xi32> to vector<8x16xf32>
    %234 = vector.extract_strided_slice %227 {offsets = [0, 1], sizes = [8, 1], strides = [1, 1]} : vector<8x2xi32> to vector<8x1xi32>
    %235 = vector.broadcast %234 : vector<8x1xi32> to vector<8x16xi32>
    %236 = arith.cmpi eq, %228, %235 : vector<8x16xi32>
    %237 = arith.extui %236 : vector<8x16xi1> to vector<8x16xi32>
    %238 = arith.sitofp %237 : vector<8x16xi32> to vector<8x16xf32>
    %cst_80 = arith.constant dense<0.000000e+00> : vector<8x16xf32>
    %239 = tpu.matmul %233, %226, %cst_80 {dimension_numbers = #tpu.dot_dimension_numbers<[1], [0], [0], [1], [0, 0, 1, 1], [], []>} : vector<8x16xf32>, vector<16x16xf32>, vector<8x16xf32> -> vector<8x16xf32>
    %cst_81 = arith.constant dense<0.000000e+00> : vector<8x16xf32>
    %240 = tpu.matmul %238, %226, %cst_81 {dimension_numbers = #tpu.dot_dimension_numbers<[1], [0], [0], [1], [0, 0, 1, 1], [], []>} : vector<8x16xf32>, vector<16x16xf32>, vector<8x16xf32> -> vector<8x16xf32>
    %241 = tpu.concatenate %239, %240 in 1 : vector<8x16xf32>, vector<8x16xf32> -> vector<8x32xf32>
    %c0_82 = arith.constant 0 : index
    %c0_83 = arith.constant 0 : index
    %242 = vector.load %arg12[%c0_82, %c0_83] : memref<32x64xf32, #tpu.memory_space<vmem>>, vector<32x64xf32>
    %cst_84 = arith.constant dense<0.000000e+00> : vector<8x64xf32>
    %243 = tpu.matmul %241, %242, %cst_84 {dimension_numbers = #tpu.dot_dimension_numbers<[1], [0], [0], [1], [0, 0, 1, 1], [], []>} : vector<8x32xf32>, vector<32x64xf32>, vector<8x64xf32> -> vector<8x64xf32>
    %c0_85 = arith.constant 0 : index
    %c0_86 = arith.constant 0 : index
    %244 = vector.load %arg13[%c0_85, %c0_86] : memref<1x64xf32, #tpu.memory_space<vmem>>, vector<1x64xf32>
    %245 = vector.broadcast %244 : vector<1x64xf32> to vector<8x64xf32>
    %246 = arith.addf %243, %245 : vector<8x64xf32>
    %cst_87 = arith.constant 0.000000e+00 : f32
    %247 = vector.broadcast %cst_87 : f32 to vector<8x64xf32>
    %248 = arith.maximumf %246, %247 : vector<8x64xf32>
    %c0_88 = arith.constant 0 : index
    %c0_89 = arith.constant 0 : index
    %249 = vector.load %arg14[%c0_88, %c0_89] : memref<1x64xf32, #tpu.memory_space<vmem>>, vector<1x64xf32>
    %250 = vector.broadcast %249 : vector<1x64xf32> to vector<8x64xf32>
    %251 = arith.mulf %248, %250 : vector<8x64xf32>
    %cst_90 = arith.constant dense<0.000000e+00> : vector<8xf32>
    %252 = vector.multi_reduction <add>, %251, %cst_90 [1] : vector<8x64xf32> to vector<8xf32>
    %253 = vector.shape_cast %252 : vector<8xf32> to vector<8x1xf32>
    %c0_91 = arith.constant 0 : index
    %c0_92 = arith.constant 0 : index
    %254 = vector.load %arg15[%c0_91, %c0_92] : memref<1x1xf32, #tpu.memory_space<vmem>>, vector<1x1xf32>
    %255 = vector.broadcast %254 : vector<1x1xf32> to vector<8x1xf32>
    %256 = arith.addf %253, %255 : vector<8x1xf32>
    %c0_93 = arith.constant 0 : index
    %c0_94 = arith.constant 0 : index
    %257 = vector.load %arg16[%c0_93, %c0_94] : memref<8x1xf32, #tpu.memory_space<vmem>>, vector<8x1xf32>
    tpu.vector_store %arg16[%c0_93, %c0_94], %256 {strides = array<i32>} : memref<8x1xf32, #tpu.memory_space<vmem>>, vector<8x1xf32>,
    return
  }
  func.func @transform_0(%arg0: i32) -> (i32, i32) {
    %c0_i32 = arith.constant 0 : i32
    %c0_i32_0 = arith.constant 0 : i32
    %c0_i32_1 = arith.constant 0 : i32
    return %c0_i32, %c0_i32_0 : i32, i32
  }
  func.func @transform_1(%arg0: i32) -> (i32, i32) {
    %c0_i32 = arith.constant 0 : i32
    %c0_i32_0 = arith.constant 0 : i32
    %c0_i32_1 = arith.constant 0 : i32
    return %c0_i32, %c0_i32_0 : i32, i32
  }
  func.func @transform_2(%arg0: i32) -> (i32, i32) {
    %c0_i32 = arith.constant 0 : i32
    %c0_i32_0 = arith.constant 0 : i32
    %c0_i32_1 = arith.constant 0 : i32
    return %c0_i32, %c0_i32_0 : i32, i32
  }
  func.func @transform_3(%arg0: i32) -> (i32, i32) {
    %c0_i32 = arith.constant 0 : i32
    %c0_i32_0 = arith.constant 0 : i32
    %c0_i32_1 = arith.constant 0 : i32
    return %c0_i32, %c0_i32_0 : i32, i32
  }
  func.func @transform_4(%arg0: i32) -> (i32, i32) {
    %c0_i32 = arith.constant 0 : i32
    %c0_i32_0 = arith.constant 0 : i32
    %c0_i32_1 = arith.constant 0 : i32
    return %c0_i32, %c0_i32_0 : i32, i32
  }
  func.func @transform_5(%arg0: i32) -> (i32, i32) {
    %c0_i32 = arith.constant 0 : i32
    %c0_i32_0 = arith.constant 0 : i32
    %c0_i32_1 = arith.constant 0 : i32
    return %c0_i32, %c0_i32_0 : i32, i32
  }
  func.func @transform_6(%arg0: i32) -> (i32, i32) {
    %c0_i32 = arith.constant 0 : i32
    %c0_i32_0 = arith.constant 0 : i32
    %c0_i32_1 = arith.constant 0 : i32
    return %c0_i32, %c0_i32_0 : i32, i32
  }
  func.func @transform_7(%arg0: i32) -> (i32, i32) {
    %c0_i32 = arith.constant 0 : i32
    %c0_i32_0 = arith.constant 0 : i32
    %c0_i32_1 = arith.constant 0 : i32
    return %c0_i32, %c0_i32_0 : i32, i32
  }
  func.func @transform_8(%arg0: i32) -> (i32, i32) {
    %c0_i32 = arith.constant 0 : i32
    %c0_i32_0 = arith.constant 0 : i32
    %c0_i32_1 = arith.constant 0 : i32
    return %c0_i32, %c0_i32_0 : i32, i32
  }
  func.func @transform_9(%arg0: i32) -> (i32, i32) {
    %c0_i32 = arith.constant 0 : i32
    %c0_i32_0 = arith.constant 0 : i32
    %c0_i32_1 = arith.constant 0 : i32
    return %c0_i32, %c0_i32_0 : i32, i32
  }
  func.func @transform_10(%arg0: i32) -> (i32, i32) {
    %c0_i32 = arith.constant 0 : i32
    %c0_i32_0 = arith.constant 0 : i32
    %c0_i32_1 = arith.constant 0 : i32
    return %c0_i32, %c0_i32_0 : i32, i32
  }
  func.func @transform_11(%arg0: i32) -> (i32, i32) {
    %c0_i32 = arith.constant 0 : i32
    %c0_i32_0 = arith.constant 0 : i32
    %c0_i32_1 = arith.constant 0 : i32
    return %c0_i32, %c0_i32_0 : i32, i32
  }
  func.func @transform_12(%arg0: i32) -> (i32, i32) {
    %c0_i32 = arith.constant 0 : i32
    %c0_i32_0 = arith.constant 0 : i32
    %c0_i32_1 = arith.constant 0 : i32
    return %c0_i32, %c0_i32_0 : i32, i32
  }
  func.func @transform_13(%arg0: i32) -> (i32, i32) {
    %c0_i32 = arith.constant 0 : i32
    %c0_i32_0 = arith.constant 0 : i32
    %c0_i32_1 = arith.constant 0 : i32
    return %c0_i32, %c0_i32_0 : i32, i32
  }
  func.func @transform_14(%arg0: i32) -> (i32, i32) {
    %c0_i32 = arith.constant 0 : i32
    %c0_i32_0 = arith.constant 0 : i32
    %c0_i32_1 = arith.constant 0 : i32
    return %c0_i32, %c0_i32_0 : i32, i32
  }
  func.func @transform_15(%arg0: i32) -> (i32, i32) {
    %c0_i32 = arith.constant 0 : i32
    %c0_i32_0 = arith.constant 0 : i32
    %c0_i32_1 = arith.constant 0 : i32
    return %c0_i32, %c0_i32_0 : i32, i32
  }
}

</mosaic_0001>

<llo_original>
// kernel: tpu_custom_call.1
$region0: #{tpu_custom_call.1}
  #allocation0 [shape = 'u32[]', space=smem, size = 0x4, offset = 0x4, fixed_abs, tag = 'smem constant byte address 0x4 - core index']
  #allocation1 [shape = 'u32[144,128]{1,0:T(1,128)}', space=vmem, size = 0x12000, scoped, tag = 'internal scratch']
  #allocation2 [shape = 'f32[1,1]{1,0:T(1,128)S(1)}', space=vmem, size = 0x200, scoped, tag = 'scoped memory for tpu_custom_call.1']
  %s0 = inlined_call_operand.vmem [shape: s32[8,2], index: 0, kind: input, shape index: {}]
  %s1 = inlined_call_operand.vmem [shape: f32[16,16], index: 1, kind: input, shape index: {}]
  %s2 = inlined_call_operand.vmem [shape: f32[16,16], index: 2, kind: input, shape index: {}]
  %s3 = inlined_call_operand.vmem [shape: f32[16,32], index: 3, kind: input, shape index: {}]
  %s4 = inlined_call_operand.vmem [shape: f32[4,32], index: 4, kind: input, shape index: {}]
  %s5 = inlined_call_operand.vmem [shape: f32[32,4], index: 5, kind: input, shape index: {}]
  %s6 = inlined_call_operand.vmem [shape: f32[1,32], index: 6, kind: input, shape index: {}]
  %s7 = inlined_call_operand.vmem [shape: f32[32,64], index: 7, kind: input, shape index: {}]
  %s8 = inlined_call_operand.vmem [shape: f32[4,64], index: 8, kind: input, shape index: {}]
  %s9 = inlined_call_operand.vmem [shape: f32[64,4], index: 9, kind: input, shape index: {}]
  %s10 = inlined_call_operand.vmem [shape: f32[1,16], index: 10, kind: input, shape index: {}]
  %s11 = inlined_call_operand.vmem [shape: f32[32,64], index: 11, kind: input, shape index: {}]
  %s12 = inlined_call_operand.vmem [shape: f32[1,64], index: 12, kind: input, shape index: {}]
  %s13 = inlined_call_operand.vmem [shape: f32[1,64], index: 13, kind: input, shape index: {}]
  %s14 = inlined_call_operand.<no memory space> [shape: f32[1,1], index: 14, kind: input, shape index: {}]
  %s15 = inlined_call_operand.vmem [shape: f32[8,1], index: 15, kind: output, shape index: {}]
  %s16 = sld [smem:[#allocation0]]
  $region70: #{tpu_custom_call.1} parent=0
    _
  %s18 = ssub.s32 1, %s16
  %s19 = scalar_select 0, %s18, %s16
  %v20 = vstv %s14
  %21 = vst [vmem:[#allocation2] sm:$0x1] %v20
  // Predicated region
  $region2: #{tpu_custom_call.1} parent=0 // pred_check
    _
  $region3: #{tpu_custom_call.1} parent=0 // pred_check_branch
    %23 = sbr.rel (0) target = $region5
  $region4: #{tpu_custom_call.1} parent=0 // pred_region
    _
  $region5: #{tpu_custom_call.1} parent=0 // pred_fallthru
    _
  // Predicated region
  $region6: #{tpu_custom_call.1} parent=0 // pred_check
    _
  $region7: #{tpu_custom_call.1} parent=0 // pred_check_branch
    %25 = sbr.rel (0) target = $region9
  $region8: #{tpu_custom_call.1} parent=0 // pred_region
    _
  $region9: #{tpu_custom_call.1} parent=0 // pred_fallthru
    _
  // Predicated region
  $region10: #{tpu_custom_call.1} parent=0 // pred_check
    _
  $region11: #{tpu_custom_call.1} parent=0 // pred_check_branch
    %27 = sbr.rel (0) target = $region13
  $region12: #{tpu_custom_call.1} parent=0 // pred_region
    _
  $region13: #{tpu_custom_call.1} parent=0 // pred_fallthru
    _
  // Predicated region
  $region14: #{tpu_custom_call.1} parent=0 // pred_check
    _
  $region15: #{tpu_custom_call.1} parent=0 // pred_check_branch
    %29 = sbr.rel (0) target = $region17
  $region16: #{tpu_custom_call.1} parent=0 // pred_region
    _
  $region17: #{tpu_custom_call.1} parent=0 // pred_fallthru
    _
  // Predicated region
  $region18: #{tpu_custom_call.1} parent=0 // pred_check
    _
  $region19: #{tpu_custom_call.1} parent=0 // pred_check_branch
    %31 = sbr.rel (0) target = $region21
  $region20: #{tpu_custom_call.1} parent=0 // pred_region
    _
  $region21: #{tpu_custom_call.1} parent=0 // pred_fallthru
    _
  // Predicated region
  $region22: #{tpu_custom_call.1} parent=0 // pred_check
    _
  $region23: #{tpu_custom_call.1} parent=0 // pred_check_branch
    %33 = sbr.rel (0) target = $region25
  $region24: #{tpu_custom_call.1} parent=0 // pred_region
    _
  $region25: #{tpu_custom_call.1} parent=0 // pred_fallthru
    _
  // Predicated region
  $region26: #{tpu_custom_call.1} parent=0 // pred_check
    _
  $region27: #{tpu_custom_call.1} parent=0 // pred_check_branch
    %35 = sbr.rel (0) target = $region29
  $region28: #{tpu_custom_call.1} parent=0 // pred_region
    _
  $region29: #{tpu_custom_call.1} parent=0 // pred_fallthru
    _
  // Predicated region
  $region30: #{tpu_custom_call.1} parent=0 // pred_check
    _
  $region31: #{tpu_custom_call.1} parent=0 // pred_check_branch
    %37 = sbr.rel (0) target = $region33
  $region32: #{tpu_custom_call.1} parent=0 // pred_region
    _
  $region33: #{tpu_custom_call.1} parent=0 // pred_fallthru
    _
  // Predicated region
  $region34: #{tpu_custom_call.1} parent=0 // pred_check
    _
  $region35: #{tpu_custom_call.1} parent=0 // pred_check_branch
    %39 = sbr.rel (0) target = $region37
  $region36: #{tpu_custom_call.1} parent=0 // pred_region
    _
  $region37: #{tpu_custom_call.1} parent=0 // pred_fallthru
    _
  // Predicated region
  $region38: #{tpu_custom_call.1} parent=0 // pred_check
    _
  $region39: #{tpu_custom_call.1} parent=0 // pred_check_branch
    %41 = sbr.rel (0) target = $region41
  $region40: #{tpu_custom_call.1} parent=0 // pred_region
    _
  $region41: #{tpu_custom_call.1} parent=0 // pred_fallthru
    _
  // Predicated region
  $region42: #{tpu_custom_call.1} parent=0 // pred_check
    _
  $region43: #{tpu_custom_call.1} parent=0 // pred_check_branch
    %43 = sbr.rel (0) target = $region45
  $region44: #{tpu_custom_call.1} parent=0 // pred_region
    _
  $region45: #{tpu_custom_call.1} parent=0 // pred_fallthru
    _
  // Predicated region
  $region46: #{tpu_custom_call.1} parent=0 // pred_check
    _
  $region47: #{tpu_custom_call.1} parent=0 // pred_check_branch
    %45 = sbr.rel (0) target = $region49
  $region48: #{tpu_custom_call.1} parent=0 // pred_region
    _
  $region49: #{tpu_custom_call.1} parent=0 // pred_fallthru
    _
  // Predicated region
  $region50: #{tpu_custom_call.1} parent=0 // pred_check
    _
  $region51: #{tpu_custom_call.1} parent=0 // pred_check_branch
    %47 = sbr.rel (0) target = $region53
  $region52: #{tpu_custom_call.1} parent=0 // pred_region
    _
  $region53: #{tpu_custom_call.1} parent=0 // pred_fallthru
    _
  // Predicated region
  $region54: #{tpu_custom_call.1} parent=0 // pred_check
    _
  $region55: #{tpu_custom_call.1} parent=0 // pred_check_branch
    %49 = sbr.rel (0) target = $region57
  $region56: #{tpu_custom_call.1} parent=0 // pred_region
    _
  $region57: #{tpu_custom_call.1} parent=0 // pred_fallthru
    _
  // Predicated region
  $region58: #{tpu_custom_call.1} parent=0 // pred_check
    _
  $region59: #{tpu_custom_call.1} parent=0 // pred_check_branch
    %51 = sbr.rel (0) target = $region61
  $region60: #{tpu_custom_call.1} parent=0 // pred_region
    _
  $region61: #{tpu_custom_call.1} parent=0 // pred_fallthru
    _
  %v52 = vld [vmem:[%s1] sm:$0xff]
  %v53 = vld [vmem:[%s1 + $0x8] sm:$0xff]
  %v54 = vld [vmem:[%s2] sm:$0xff]
  %v55 = vld [vmem:[%s2 + $0x8] sm:$0xff]
  %vm56 = vcmp.gt.f32.partialorder %v54, 0.0
  %vm57 = vcmp.gt.f32.partialorder %v55, 0.0
  %v58 = vsel %vm56, 0.0, -1e+30
  %v59 = vsel %vm57, 0.0, -1e+30
  %v60 = vld [vmem:[%s3] sm:$0xff]
  %v61 = vld [vmem:[%s3 + $0x8] sm:$0xff]
  %vm62 = vcmask 130048
  %v64 = vsel %vm62, %v52, 0
  %v67 = vsel %vm62, %v53, 0
  %69 = vmatprep.subr.mxu0 0.0
  %70 = vmatpush1.msra.mxu0 %v60
  %71 = vmatprep.subr.mxu0 0.0
  %72 = vmatpush1.msra.mxu0 %v61
  %73 = vmatprep.subr.mxu0 0.0
  %74 = vmatpush1.msra.mxu0 0.0
  %75 = vmatprep.subr.mxu0 0.0
  %76 = vmatpush1.msra.mxu0 0.0
  %77 = vmatprep.subr.mxu0 0.0
  %78 = vmatpush1.msra.mxu0 0.0
  %79 = vmatprep.subr.mxu0 0.0
  %80 = vmatpush1.msra.mxu0 0.0
  %81 = vmatprep.subr.mxu0 0.0
  %82 = vmatpush1.msra.mxu0 0.0
  %83 = vmatprep.subr.mxu0 0.0
  %84 = vmatpush1.msra.mxu0 0.0
  %85 = vmatprep.subr.mxu0 0.0
  %86 = vmatpush1.msra.mxu0 0.0
  %87 = vmatprep.subr.mxu0 0.0
  %88 = vmatpush1.msra.mxu0 0.0
  %89 = vmatprep.subr.mxu0 0.0
  %90 = vmatpush1.msra.mxu0 0.0
  %91 = vmatprep.subr.mxu0 0.0
  %92 = vmatpush1.msra.mxu0 0.0
  %93 = vmatprep.subr.mxu0 0.0
  %94 = vmatpush1.msra.mxu0 0.0
  %95 = vmatprep.subr.mxu0 0.0
  %96 = vmatpush1.msra.mxu0 0.0
  %97 = vmatprep.subr.mxu0 0.0
  %98 = vmatpush1.msra.mxu0 0.0
  %99 = vmatprep.subr.mxu0 0.0
  %100 = vmatpush1.msra.mxu0 0.0
  %101 = vmatprep.subr.mxu0 0.0
  %102 = vmatpush1.msra.mxu0 0.0
  %103 = vmatprep.subr.mxu0 0.0
  %104 = vmatpush1.msra.mxu0 0.0
  %105 = vmatprep.subr.mxu0 0.0
  %106 = vmatpush1.msra.mxu0 0.0
  %107 = vmatprep.subr.mxu0 0.0
  %108 = vmatpush1.msra.mxu0 0.0
  %109 = vmatprep.subr.mxu0 0.0
  %110 = vmatpush1.msra.mxu0 0.0
  %111 = vmatprep.subr.mxu0 0.0
  %112 = vmatpush1.msra.mxu0 0.0
  %113 = vmatprep.subr.mxu0 0.0
  %114 = vmatpush1.msra.mxu0 0.0
  %115 = vmatprep.subr.mxu0 0.0
  %116 = vmatpush1.msra.mxu0 0.0
  %117 = vmatprep.subr.mxu0 0.0
  %118 = vmatpush1.msra.mxu0 0.0
  %119 = vmatprep.subr.mxu0 0.0
  %120 = vmatpush1.msra.mxu0 0.0
  %121 = vmatprep.subr.mxu0 0.0
  %122 = vmatpush1.msra.mxu0 0.0
  %123 = vmatprep.subr.mxu0 0.0
  %124 = vmatpush1.msra.mxu0 0.0
  %125 = vmatprep.subr.mxu0 0.0
  %126 = vmatpush1.msra.mxu0 0.0
  %127 = vmatprep.subr.mxu0 0.0
  %128 = vmatpush1.msra.mxu0 0.0
  %129 = vmatprep.subr.mxu0 0.0
  %130 = vmatpush1.msra.mxu0 0.0
  %131 = vmatprep.subr.mxu0 0.0
  %132 = vmatpush1.msra.mxu0 0.0
  %133 = vmatprep.mubr.f32.mxu0 0.0
  %134 = vmatmul.mubr.f32.gmra.mrb[0].mxu0 %v64
  %v135 = vpop.f32.mrb[0].mxu0
  %v136 = vadd.f32 0.0, %v135
  %v137 = vpop.f32.mrb[0].mxu0
  %138 = vmatprep.mubr.f32.mxu0 0.0
  %139 = vmatmul.mubr.f32.gmra.mrb[0].mxu0 %v67
  %v140 = vpop.f32.mrb[0].mxu0
  %v141 = vadd.f32 0.0, %v140
  %v142 = vpop.f32.mrb[0].mxu0
  %143 = vdwg.mxu0
  %v144 = vld [vmem:[%s4] sm:$0xf]
  %v145 = vld [vmem:[%s5] sm:$0xff]
  %v146 = vld [vmem:[%s5 + $0x8] sm:$0xff]
  %v147 = vld [vmem:[%s5 + $0x10] sm:$0xff]
  %v148 = vld [vmem:[%s5 + $0x18] sm:$0xff]
  %vm149 = vcmask 261120
  %v151 = vsel %vm149, %v136, 0
  %v154 = vsel %vm149, %v141, 0
  %156 = vmatprep.subr.mxu0 0.0
  %157 = vmatpush1.msra.mxu0 %v145
  %158 = vmatprep.subr.mxu0 0.0
  %159 = vmatpush1.msra.mxu0 %v146
  %160 = vmatprep.subr.mxu0 0.0
  %161 = vmatpush1.msra.mxu0 %v147
  %162 = vmatprep.subr.mxu0 0.0
  %163 = vmatpush1.msra.mxu0 %v148
  %164 = vmatprep.subr.mxu0 0.0
  %165 = vmatpush1.msra.mxu0 0.0
  %166 = vmatprep.subr.mxu0 0.0
  %167 = vmatpush1.msra.mxu0 0.0
  %168 = vmatprep.subr.mxu0 0.0
  %169 = vmatpush1.msra.mxu0 0.0
  %170 = vmatprep.subr.mxu0 0.0
  %171 = vmatpush1.msra.mxu0 0.0
  %172 = vmatprep.subr.mxu0 0.0
  %173 = vmatpush1.msra.mxu0 0.0
  %174 = vmatprep.subr.mxu0 0.0
  %175 = vmatpush1.msra.mxu0 0.0
  %176 = vmatprep.subr.mxu0 0.0
  %177 = vmatpush1.msra.mxu0 0.0
  %178 = vmatprep.subr.mxu0 0.0
  %179 = vmatpush1.msra.mxu0 0.0
  %180 = vmatprep.subr.mxu0 0.0
  %181 = vmatpush1.msra.mxu0 0.0
  %182 = vmatprep.subr.mxu0 0.0
  %183 = vmatpush1.msra.mxu0 0.0
  %184 = vmatprep.subr.mxu0 0.0
  %185 = vmatpush1.msra.mxu0 0.0
  %186 = vmatprep.subr.mxu0 0.0
  %187 = vmatpush1.msra.mxu0 0.0
  %188 = vmatprep.subr.mxu0 0.0
  %189 = vmatpush1.msra.mxu0 0.0
  %190 = vmatprep.subr.mxu0 0.0
  %191 = vmatpush1.msra.mxu0 0.0
  %192 = vmatprep.subr.mxu0 0.0
  %193 = vmatpush1.msra.mxu0 0.0
  %194 = vmatprep.subr.mxu0 0.0
  %195 = vmatpush1.msra.mxu0 0.0
  %196 = vmatprep.subr.mxu0 0.0
  %197 = vmatpush1.msra.mxu0 0.0
  %198 = vmatprep.subr.mxu0 0.0
  %199 = vmatpush1.msra.mxu0 0.0
  %200 = vmatprep.subr.mxu0 0.0
  %201 = vmatpush1.msra.mxu0 0.0
  %202 = vmatprep.subr.mxu0 0.0
  %203 = vmatpush1.msra.mxu0 0.0
  %204 = vmatprep.subr.mxu0 0.0
  %205 = vmatpush1.msra.mxu0 0.0
  %206 = vmatprep.subr.mxu0 0.0
  %207 = vmatpush1.msra.mxu0 0.0
  %208 = vmatprep.subr.mxu0 0.0
  %209 = vmatpush1.msra.mxu0 0.0
  %210 = vmatprep.subr.mxu0 0.0
  %211 = vmatpush1.msra.mxu0 0.0
  %212 = vmatprep.subr.mxu0 0.0
  %213 = vmatpush1.msra.mxu0 0.0
  %214 = vmatprep.subr.mxu0 0.0
  %215 = vmatpush1.msra.mxu0 0.0
  %216 = vmatprep.subr.mxu0 0.0
  %217 = vmatpush1.msra.mxu0 0.0
  %218 = vmatprep.subr.mxu0 0.0
  %219 = vmatpush1.msra.mxu0 0.0
  %220 = vmatprep.mubr.f32.mxu0 0.0
  %221 = vmatmul.mubr.f32.gmra.mrb[0].mxu0 %v151
  %v222 = vpop.f32.mrb[0].mxu0
  %v223 = vadd.f32 0.0, %v222
  %v224 = vpop.f32.mrb[0].mxu0
  %225 = vmatprep.mubr.f32.mxu0 0.0
  %226 = vmatmul.mubr.f32.gmra.mrb[0].mxu0 %v154
  %v227 = vpop.f32.mrb[0].mxu0
  %v228 = vadd.f32 0.0, %v227
  %v229 = vpop.f32.mrb[0].mxu0
  %230 = vdwg.mxu0
  %v232 = vsel %vm149, %v144, 0
  %234 = vmatprep.subr.mxu0 0.0
  %235 = vmatpush1.xpose.msra.mxu0 %v151
  %236 = vmatprep.subr.mxu0 0.0
  %237 = vmatpush1.xpose.msra.mxu0 %v154
  %238 = vmatprep.subr.mxu0 0.0
  %239 = vmatpush1.xpose.msra.mxu0 0.0
  %240 = vmatprep.subr.mxu0 0.0
  %241 = vmatpush1.xpose.msra.mxu0 0.0
  %242 = vmatprep.subr.mxu0 0.0
  %243 = vmatpush1.xpose.msra.mxu0 0.0
  %244 = vmatprep.subr.mxu0 0.0
  %245 = vmatpush1.xpose.msra.mxu0 0.0
  %246 = vmatprep.subr.mxu0 0.0
  %247 = vmatpush1.xpose.msra.mxu0 0.0
  %248 = vmatprep.subr.mxu0 0.0
  %249 = vmatpush1.xpose.msra.mxu0 0.0
  %250 = vmatprep.subr.mxu0 0.0
  %251 = vmatpush1.xpose.msra.mxu0 0.0
  %252 = vmatprep.subr.mxu0 0.0
  %253 = vmatpush1.xpose.msra.mxu0 0.0
  %254 = vmatprep.subr.mxu0 0.0
  %255 = vmatpush1.xpose.msra.mxu0 0.0
  %256 = vmatprep.subr.mxu0 0.0
  %257 = vmatpush1.xpose.msra.mxu0 0.0
  %258 = vmatprep.subr.mxu0 0.0
  %259 = vmatpush1.xpose.msra.mxu0 0.0
  %260 = vmatprep.subr.mxu0 0.0
  %261 = vmatpush1.xpose.msra.mxu0 0.0
  %262 = vmatprep.subr.mxu0 0.0
  %263 = vmatpush1.xpose.msra.mxu0 0.0
  %264 = vmatprep.subr.mxu0 0.0
  %265 = vmatpush1.xpose.msra.mxu0 0.0
  %266 = vmatprep.subr.mxu0 0.0
  %267 = vmatpush1.xpose.msra.mxu0 0.0
  %268 = vmatprep.subr.mxu0 0.0
  %269 = vmatpush1.xpose.msra.mxu0 0.0
  %270 = vmatprep.subr.mxu0 0.0
  %271 = vmatpush1.xpose.msra.mxu0 0.0
  %272 = vmatprep.subr.mxu0 0.0
  %273 = vmatpush1.xpose.msra.mxu0 0.0
  %274 = vmatprep.subr.mxu0 0.0
  %275 = vmatpush1.xpose.msra.mxu0 0.0
  %276 = vmatprep.subr.mxu0 0.0
  %277 = vmatpush1.xpose.msra.mxu0 0.0
  %278 = vmatprep.subr.mxu0 0.0
  %279 = vmatpush1.xpose.msra.mxu0 0.0
  %280 = vmatprep.subr.mxu0 0.0
  %281 = vmatpush1.xpose.msra.mxu0 0.0
  %282 = vmatprep.subr.mxu0 0.0
  %283 = vmatpush1.xpose.msra.mxu0 0.0
  %284 = vmatprep.subr.mxu0 0.0
  %285 = vmatpush1.xpose.msra.mxu0 0.0
  %286 = vmatprep.subr.mxu0 0.0
  %287 = vmatpush1.xpose.msra.mxu0 0.0
  %288 = vmatprep.subr.mxu0 0.0
  %289 = vmatpush1.xpose.msra.mxu0 0.0
  %290 = vmatprep.subr.mxu0 0.0
  %291 = vmatpush1.xpose.msra.mxu0 0.0
  %292 = vmatprep.subr.mxu0 0.0
  %293 = vmatpush1.xpose.msra.mxu0 0.0
  %294 = vmatprep.subr.mxu0 0.0
  %295 = vmatpush1.xpose.msra.mxu0 0.0
  %296 = vmatprep.subr.mxu0 0.0
  %297 = vmatpush1.xpose.msra.mxu0 0.0
  %298 = vmatprep.mubr.f32.mxu0 0.0
  %299 = vmatmul.mubr.f32.gmra.mrb[0].mxu0 %v232
  %v300 = vpop.f32.mrb[0].mxu0
  %v301 = vadd.f32 0.0, %v300
  %v302 = vpop.f32.mrb[0].mxu0
  %303 = vdwg.mxu0
  %305 = vset.pattern.permute.xlu0 0
  %306 = vperm.xlu0 %305, %v223
  %v307 = vpop.permute.xlu0 %306
  %310 = vset.pattern.permute.xlu0 0
  %311 = vperm.xlu0 %310, %v228
  %v312 = vpop.permute.xlu0 %311
  %v314 = vlaneseq
  %v315 = vshrl.u32 %v314, 7
  %v316 = vsub.s32 0, %v315
  %v317 = vrot.slane %v301, %v316
  %v318 = vadd.f32 %v307, %v317
  %v319 = vadd.f32 %v312, %v317
  %vm320 = vcmp.gt.f32.partialorder %v318, 0.0
  %vm321 = vcmp.gt.f32.partialorder %v319, 0.0
  %v322 = vmul.f32 %v318, 0.2
  %v323 = vmul.f32 %v319, 0.2
  %v324 = vsel %vm320, %v318, %v322
  %v325 = vsel %vm321, %v319, %v323
  %v326 = vadd.f32 %v324, %v58
  %v327 = vadd.f32 %v325, %v59
  %v328 = vsel %vm62, %v326, -inf
  %329 = vmax.xlane.f32.xlu0 %v328
  %v330 = vpop.xlane.xlu0 %329
  %v331 = vsel %vm62, %v327, -inf
  %332 = vmax.xlane.f32.xlu0 %v331
  %v333 = vpop.xlane.xlu0 %332
  %v334 = vsub.f32 %v326, %v330
  %v335 = vsub.f32 %v327, %v333
  %v336 = vmul.f32 %v334, 1.442695
  %v337 = vpow.pop %v336
  %v338 = vmul.f32 %v335, 1.442695
  %v339 = vpow.pop %v338
  %v340 = vsel %vm62, %v337, 0.0
  %341 = vadd.xlane.f32.xlu0 %v340
  %v342 = vpop.xlane.xlu0 %341
  %v343 = vsel %vm62, %v339, 0.0
  %344 = vadd.xlane.f32.xlu0 %v343
  %v345 = vpop.xlane.xlu0 %344
  %v346 = vmax.f32 %v342, 1e-20
  %v347 = vmax.f32 %v345, 1e-20
  %v348 = vrcp.pop %v346
  %v349 = vmul.f32 %v337, %v348
  %v350 = vrcp.pop %v347
  %v351 = vmul.f32 %v339, %v350
  %v353 = vsel %vm62, %v349, 0
  %v356 = vsel %vm62, %v351, 0
  %358 = vmatprep.subr.mxu0 0.0
  %359 = vmatpush1.msra.mxu0 %v136
  %360 = vmatprep.subr.mxu0 0.0
  %361 = vmatpush1.msra.mxu0 %v141
  %362 = vmatprep.subr.mxu0 0.0
  %363 = vmatpush1.msra.mxu0 0.0
  %364 = vmatprep.subr.mxu0 0.0
  %365 = vmatpush1.msra.mxu0 0.0
  %366 = vmatprep.subr.mxu0 0.0
  %367 = vmatpush1.msra.mxu0 0.0
  %368 = vmatprep.subr.mxu0 0.0
  %369 = vmatpush1.msra.mxu0 0.0
  %370 = vmatprep.subr.mxu0 0.0
  %371 = vmatpush1.msra.mxu0 0.0
  %372 = vmatprep.subr.mxu0 0.0
  %373 = vmatpush1.msra.mxu0 0.0
  %374 = vmatprep.subr.mxu0 0.0
  %375 = vmatpush1.msra.mxu0 0.0
  %376 = vmatprep.subr.mxu0 0.0
  %377 = vmatpush1.msra.mxu0 0.0
  %378 = vmatprep.subr.mxu0 0.0
  %379 = vmatpush1.msra.mxu0 0.0
  %380 = vmatprep.subr.mxu0 0.0
  %381 = vmatpush1.msra.mxu0 0.0
  %382 = vmatprep.subr.mxu0 0.0
  %383 = vmatpush1.msra.mxu0 0.0
  %384 = vmatprep.subr.mxu0 0.0
  %385 = vmatpush1.msra.mxu0 0.0
  %386 = vmatprep.subr.mxu0 0.0
  %387 = vmatpush1.msra.mxu0 0.0
  %388 = vmatprep.subr.mxu0 0.0
  %389 = vmatpush1.msra.mxu0 0.0
  %390 = vmatprep.subr.mxu0 0.0
  %391 = vmatpush1.msra.mxu0 0.0
  %392 = vmatprep.subr.mxu0 0.0
  %393 = vmatpush1.msra.mxu0 0.0
  %394 = vmatprep.subr.mxu0 0.0
  %395 = vmatpush1.msra.mxu0 0.0
  %396 = vmatprep.subr.mxu0 0.0
  %397 = vmatpush1.msra.mxu0 0.0
  %398 = vmatprep.subr.mxu0 0.0
  %399 = vmatpush1.msra.mxu0 0.0
  %400 = vmatprep.subr.mxu0 0.0
  %401 = vmatpush1.msra.mxu0 0.0
  %402 = vmatprep.subr.mxu0 0.0
  %403 = vmatpush1.msra.mxu0 0.0
  %404 = vmatprep.subr.mxu0 0.0
  %405 = vmatpush1.msra.mxu0 0.0
  %406 = vmatprep.subr.mxu0 0.0
  %407 = vmatpush1.msra.mxu0 0.0
  %408 = vmatprep.subr.mxu0 0.0
  %409 = vmatpush1.msra.mxu0 0.0
  %410 = vmatprep.subr.mxu0 0.0
  %411 = vmatpush1.msra.mxu0 0.0
  %412 = vmatprep.subr.mxu0 0.0
  %413 = vmatpush1.msra.mxu0 0.0
  %414 = vmatprep.subr.mxu0 0.0
  %415 = vmatpush1.msra.mxu0 0.0
  %416 = vmatprep.subr.mxu0 0.0
  %417 = vmatpush1.msra.mxu0 0.0
  %418 = vmatprep.subr.mxu0 0.0
  %419 = vmatpush1.msra.mxu0 0.0
  %420 = vmatprep.subr.mxu0 0.0
  %421 = vmatpush1.msra.mxu0 0.0
  %422 = vmatprep.mubr.f32.mxu0 0.0
  %423 = vmatmul.mubr.f32.gmra.mrb[0].mxu0 %v353
  %v424 = vpop.f32.mrb[0].mxu0
  %v425 = vadd.f32 0.0, %v424
  %v426 = vpop.f32.mrb[0].mxu0
  %427 = vmatprep.mubr.f32.mxu0 0.0
  %428 = vmatmul.mubr.f32.gmra.mrb[0].mxu0 %v356
  %v429 = vpop.f32.mrb[0].mxu0
  %v430 = vadd.f32 0.0, %v429
  %v431 = vpop.f32.mrb[0].mxu0
  %432 = vdwg.mxu0
  %433 = vset.pattern.permute.xlu0 1
  %434 = vperm.xlu0 %433, %v223
  %v435 = vpop.permute.xlu0 %434
  %437 = vset.pattern.permute.xlu0 1
  %438 = vperm.xlu0 %437, %v228
  %v439 = vpop.permute.xlu0 %438
  %v441 = vlaneseq
  %v442 = vshrl.u32 %v441, 7
  %v443 = vsub.s32 1, %v442
  %v444 = vrot.slane %v301, %v443
  %v445 = vadd.f32 %v435, %v444
  %v446 = vadd.f32 %v439, %v444
  %vm447 = vcmp.gt.f32.partialorder %v445, 0.0
  %vm448 = vcmp.gt.f32.partialorder %v446, 0.0
  %v449 = vmul.f32 %v445, 0.2
  %v450 = vmul.f32 %v446, 0.2
  %v451 = vsel %vm447, %v445, %v449
  %v452 = vsel %vm448, %v446, %v450
  %v453 = vadd.f32 %v451, %v58
  %v454 = vadd.f32 %v452, %v59
  %v455 = vsel %vm62, %v453, -inf
  %456 = vmax.xlane.f32.xlu0 %v455
  %v457 = vpop.xlane.xlu0 %456
  %v458 = vsel %vm62, %v454, -inf
  %459 = vmax.xlane.f32.xlu0 %v458
  %v460 = vpop.xlane.xlu0 %459
  %v461 = vsub.f32 %v453, %v457
  %v462 = vsub.f32 %v454, %v460
  %v463 = vmul.f32 %v461, 1.442695
  %v464 = vpow.pop %v463
  %v465 = vmul.f32 %v462, 1.442695
  %v466 = vpow.pop %v465
  %v467 = vsel %vm62, %v464, 0.0
  %468 = vadd.xlane.f32.xlu0 %v467
  %v469 = vpop.xlane.xlu0 %468
  %v470 = vsel %vm62, %v466, 0.0
  %471 = vadd.xlane.f32.xlu0 %v470
  %v472 = vpop.xlane.xlu0 %471
  %v473 = vmax.f32 %v469, 1e-20
  %v474 = vmax.f32 %v472, 1e-20
  %v475 = vrcp.pop %v473
  %v476 = vmul.f32 %v464, %v475
  %v477 = vrcp.pop %v474
  %v478 = vmul.f32 %v466, %v477
  %479 = vrot.lane.b32.xlu0 %v136, 120
  %v480 = vpop.permute.xlu0 %479
  %481 = vrot.lane.b32.xlu0 %v141, 120
  %v482 = vpop.permute.xlu0 %481
  %v486 = vsel %vm62, %v476, 0
  %v489 = vsel %vm62, %v478, 0
  %491 = vmatprep.subr.mxu0 0.0
  %492 = vmatpush1.msra.mxu0 %v480
  %493 = vmatprep.subr.mxu0 0.0
  %494 = vmatpush1.msra.mxu0 %v482
  %495 = vmatprep.subr.mxu0 0.0
  %496 = vmatpush1.msra.mxu0 0.0
  %497 = vmatprep.subr.mxu0 0.0
  %498 = vmatpush1.msra.mxu0 0.0
  %499 = vmatprep.subr.mxu0 0.0
  %500 = vmatpush1.msra.mxu0 0.0
  %501 = vmatprep.subr.mxu0 0.0
  %502 = vmatpush1.msra.mxu0 0.0
  %503 = vmatprep.subr.mxu0 0.0
  %504 = vmatpush1.msra.mxu0 0.0
  %505 = vmatprep.subr.mxu0 0.0
  %506 = vmatpush1.msra.mxu0 0.0
  %507 = vmatprep.subr.mxu0 0.0
  %508 = vmatpush1.msra.mxu0 0.0
  %509 = vmatprep.subr.mxu0 0.0
  %510 = vmatpush1.msra.mxu0 0.0
  %511 = vmatprep.subr.mxu0 0.0
  %512 = vmatpush1.msra.mxu0 0.0
  %513 = vmatprep.subr.mxu0 0.0
  %514 = vmatpush1.msra.mxu0 0.0
  %515 = vmatprep.subr.mxu0 0.0
  %516 = vmatpush1.msra.mxu0 0.0
  %517 = vmatprep.subr.mxu0 0.0
  %518 = vmatpush1.msra.mxu0 0.0
  %519 = vmatprep.subr.mxu0 0.0
  %520 = vmatpush1.msra.mxu0 0.0
  %521 = vmatprep.subr.mxu0 0.0
  %522 = vmatpush1.msra.mxu0 0.0
  %523 = vmatprep.subr.mxu0 0.0
  %524 = vmatpush1.msra.mxu0 0.0
  %525 = vmatprep.subr.mxu0 0.0
  %526 = vmatpush1.msra.mxu0 0.0
  %527 = vmatprep.subr.mxu0 0.0
  %528 = vmatpush1.msra.mxu0 0.0
  %529 = vmatprep.subr.mxu0 0.0
  %530 = vmatpush1.msra.mxu0 0.0
  %531 = vmatprep.subr.mxu0 0.0
  %532 = vmatpush1.msra.mxu0 0.0
  %533 = vmatprep.subr.mxu0 0.0
  %534 = vmatpush1.msra.mxu0 0.0
  %535 = vmatprep.subr.mxu0 0.0
  %536 = vmatpush1.msra.mxu0 0.0
  %537 = vmatprep.subr.mxu0 0.0
  %538 = vmatpush1.msra.mxu0 0.0
  %539 = vmatprep.subr.mxu0 0.0
  %540 = vmatpush1.msra.mxu0 0.0
  %541 = vmatprep.subr.mxu0 0.0
  %542 = vmatpush1.msra.mxu0 0.0
  %543 = vmatprep.subr.mxu0 0.0
  %544 = vmatpush1.msra.mxu0 0.0
  %545 = vmatprep.subr.mxu0 0.0
  %546 = vmatpush1.msra.mxu0 0.0
  %547 = vmatprep.subr.mxu0 0.0
  %548 = vmatpush1.msra.mxu0 0.0
  %549 = vmatprep.subr.mxu0 0.0
  %550 = vmatpush1.msra.mxu0 0.0
  %551 = vmatprep.subr.mxu0 0.0
  %552 = vmatpush1.msra.mxu0 0.0
  %553 = vmatprep.subr.mxu0 0.0
  %554 = vmatpush1.msra.mxu0 0.0
  %555 = vmatprep.mubr.f32.mxu0 0.0
  %556 = vmatmul.mubr.f32.gmra.mrb[0].mxu0 %v486
  %v557 = vpop.f32.mrb[0].mxu0
  %v558 = vadd.f32 0.0, %v557
  %v559 = vpop.f32.mrb[0].mxu0
  %560 = vmatprep.mubr.f32.mxu0 0.0
  %561 = vmatmul.mubr.f32.gmra.mrb[0].mxu0 %v489
  %v562 = vpop.f32.mrb[0].mxu0
  %v563 = vadd.f32 0.0, %v562
  %v564 = vpop.f32.mrb[0].mxu0
  %565 = vdwg.mxu0
  %566 = vset.pattern.permute.xlu0 2
  %567 = vperm.xlu0 %566, %v223
  %v568 = vpop.permute.xlu0 %567
  %570 = vset.pattern.permute.xlu0 2
  %571 = vperm.xlu0 %570, %v228
  %v572 = vpop.permute.xlu0 %571
  %v574 = vlaneseq
  %v575 = vshrl.u32 %v574, 7
  %v576 = vsub.s32 2, %v575
  %v577 = vrot.slane %v301, %v576
  %v578 = vadd.f32 %v568, %v577
  %v579 = vadd.f32 %v572, %v577
  %vm580 = vcmp.gt.f32.partialorder %v578, 0.0
  %vm581 = vcmp.gt.f32.partialorder %v579, 0.0
  %v582 = vmul.f32 %v578, 0.2
  %v583 = vmul.f32 %v579, 0.2
  %v584 = vsel %vm580, %v578, %v582
  %v585 = vsel %vm581, %v579, %v583
  %v586 = vadd.f32 %v584, %v58
  %v587 = vadd.f32 %v585, %v59
  %v588 = vsel %vm62, %v586, -inf
  %589 = vmax.xlane.f32.xlu0 %v588
  %v590 = vpop.xlane.xlu0 %589
  %v591 = vsel %vm62, %v587, -inf
  %592 = vmax.xlane.f32.xlu0 %v591
  %v593 = vpop.xlane.xlu0 %592
  %v594 = vsub.f32 %v586, %v590
  %v595 = vsub.f32 %v587, %v593
  %v596 = vmul.f32 %v594, 1.442695
  %v597 = vpow.pop %v596
  %v598 = vmul.f32 %v595, 1.442695
  %v599 = vpow.pop %v598
  %v600 = vsel %vm62, %v597, 0.0
  %601 = vadd.xlane.f32.xlu0 %v600
  %v602 = vpop.xlane.xlu0 %601
  %v603 = vsel %vm62, %v599, 0.0
  %604 = vadd.xlane.f32.xlu0 %v603
  %v605 = vpop.xlane.xlu0 %604
  %v606 = vmax.f32 %v602, 1e-20
  %v607 = vmax.f32 %v605, 1e-20
  %v608 = vrcp.pop %v606
  %v609 = vmul.f32 %v597, %v608
  %v610 = vrcp.pop %v607
  %v611 = vmul.f32 %v599, %v610
  %612 = vrot.lane.b32.xlu0 %v136, 112
  %v613 = vpop.permute.xlu0 %612
  %614 = vrot.lane.b32.xlu0 %v141, 112
  %v615 = vpop.permute.xlu0 %614
  %v619 = vsel %vm62, %v609, 0
  %v622 = vsel %vm62, %v611, 0
  %624 = vmatprep.subr.mxu0 0.0
  %625 = vmatpush1.msra.mxu0 %v613
  %626 = vmatprep.subr.mxu0 0.0
  %627 = vmatpush1.msra.mxu0 %v615
  %628 = vmatprep.subr.mxu0 0.0
  %629 = vmatpush1.msra.mxu0 0.0
  %630 = vmatprep.subr.mxu0 0.0
  %631 = vmatpush1.msra.mxu0 0.0
  %632 = vmatprep.subr.mxu0 0.0
  %633 = vmatpush1.msra.mxu0 0.0
  %634 = vmatprep.subr.mxu0 0.0
  %635 = vmatpush1.msra.mxu0 0.0
  %636 = vmatprep.subr.mxu0 0.0
  %637 = vmatpush1.msra.mxu0 0.0
  %638 = vmatprep.subr.mxu0 0.0
  %639 = vmatpush1.msra.mxu0 0.0
  %640 = vmatprep.subr.mxu0 0.0
  %641 = vmatpush1.msra.mxu0 0.0
  %642 = vmatprep.subr.mxu0 0.0
  %643 = vmatpush1.msra.mxu0 0.0
  %644 = vmatprep.subr.mxu0 0.0
  %645 = vmatpush1.msra.mxu0 0.0
  %646 = vmatprep.subr.mxu0 0.0
  %647 = vmatpush1.msra.mxu0 0.0
  %648 = vmatprep.subr.mxu0 0.0
  %649 = vmatpush1.msra.mxu0 0.0
  %650 = vmatprep.subr.mxu0 0.0
  %651 = vmatpush1.msra.mxu0 0.0
  %652 = vmatprep.subr.mxu0 0.0
  %653 = vmatpush1.msra.mxu0 0.0
  %654 = vmatprep.subr.mxu0 0.0
  %655 = vmatpush1.msra.mxu0 0.0
  %656 = vmatprep.subr.mxu0 0.0
  %657 = vmatpush1.msra.mxu0 0.0
  %658 = vmatprep.subr.mxu0 0.0
  %659 = vmatpush1.msra.mxu0 0.0
  %660 = vmatprep.subr.mxu0 0.0
  %661 = vmatpush1.msra.mxu0 0.0
  %662 = vmatprep.subr.mxu0 0.0
  %663 = vmatpush1.msra.mxu0 0.0
  %664 = vmatprep.subr.mxu0 0.0
  %665 = vmatpush1.msra.mxu0 0.0
  %666 = vmatprep.subr.mxu0 0.0
  %667 = vmatpush1.msra.mxu0 0.0
  %668 = vmatprep.subr.mxu0 0.0
  %669 = vmatpush1.msra.mxu0 0.0
  %670 = vmatprep.subr.mxu0 0.0
  %671 = vmatpush1.msra.mxu0 0.0
  %672 = vmatprep.subr.mxu0 0.0
  %673 = vmatpush1.msra.mxu0 0.0
  %674 = vmatprep.subr.mxu0 0.0
  %675 = vmatpush1.msra.mxu0 0.0
  %676 = vmatprep.subr.mxu0 0.0
  %677 = vmatpush1.msra.mxu0 0.0
  %678 = vmatprep.subr.mxu0 0.0
  %679 = vmatpush1.msra.mxu0 0.0
  %680 = vmatprep.subr.mxu0 0.0
  %681 = vmatpush1.msra.mxu0 0.0
  %682 = vmatprep.subr.mxu0 0.0
  %683 = vmatpush1.msra.mxu0 0.0
  %684 = vmatprep.subr.mxu0 0.0
  %685 = vmatpush1.msra.mxu0 0.0
  %686 = vmatprep.subr.mxu0 0.0
  %687 = vmatpush1.msra.mxu0 0.0
  %688 = vmatprep.mubr.f32.mxu0 0.0
  %689 = vmatmul.mubr.f32.gmra.mrb[0].mxu0 %v619
  %v690 = vpop.f32.mrb[0].mxu0
  %v691 = vadd.f32 0.0, %v690
  %v692 = vpop.f32.mrb[0].mxu0
  %693 = vmatprep.mubr.f32.mxu0 0.0
  %694 = vmatmul.mubr.f32.gmra.mrb[0].mxu0 %v622
  %v695 = vpop.f32.mrb[0].mxu0
  %v696 = vadd.f32 0.0, %v695
  %v697 = vpop.f32.mrb[0].mxu0
  %698 = vdwg.mxu0
  %699 = vset.pattern.permute.xlu0 3
  %700 = vperm.xlu0 %699, %v223
  %v701 = vpop.permute.xlu0 %700
  %703 = vset.pattern.permute.xlu0 3
  %704 = vperm.xlu0 %703, %v228
  %v705 = vpop.permute.xlu0 %704
  %v707 = vlaneseq
  %v708 = vshrl.u32 %v707, 7
  %v709 = vsub.s32 3, %v708
  %v710 = vrot.slane %v301, %v709
  %v711 = vadd.f32 %v701, %v710
  %v712 = vadd.f32 %v705, %v710
  %vm713 = vcmp.gt.f32.partialorder %v711, 0.0
  %vm714 = vcmp.gt.f32.partialorder %v712, 0.0
  %v715 = vmul.f32 %v711, 0.2
  %v716 = vmul.f32 %v712, 0.2
  %v717 = vsel %vm713, %v711, %v715
  %v718 = vsel %vm714, %v712, %v716
  %v719 = vadd.f32 %v717, %v58
  %v720 = vadd.f32 %v718, %v59
  %v721 = vsel %vm62, %v719, -inf
  %722 = vmax.xlane.f32.xlu0 %v721
  %v723 = vpop.xlane.xlu0 %722
  %v724 = vsel %vm62, %v720, -inf
  %725 = vmax.xlane.f32.xlu0 %v724
  %v726 = vpop.xlane.xlu0 %725
  %v727 = vsub.f32 %v719, %v723
  %v728 = vsub.f32 %v720, %v726
  %v729 = vmul.f32 %v727, 1.442695
  %v730 = vpow.pop %v729
  %v731 = vmul.f32 %v728, 1.442695
  %v732 = vpow.pop %v731
  %v733 = vsel %vm62, %v730, 0.0
  %734 = vadd.xlane.f32.xlu0 %v733
  %v735 = vpop.xlane.xlu0 %734
  %v736 = vsel %vm62, %v732, 0.0
  %737 = vadd.xlane.f32.xlu0 %v736
  %v738 = vpop.xlane.xlu0 %737
  %v739 = vmax.f32 %v735, 1e-20
  %v740 = vmax.f32 %v738, 1e-20
  %v741 = vrcp.pop %v739
  %v742 = vmul.f32 %v730, %v741
  %v743 = vrcp.pop %v740
  %v744 = vmul.f32 %v732, %v743
  %745 = vrot.lane.b32.xlu0 %v136, 104
  %v746 = vpop.permute.xlu0 %745
  %747 = vrot.lane.b32.xlu0 %v141, 104
  %v748 = vpop.permute.xlu0 %747
  %v752 = vsel %vm62, %v742, 0
  %v755 = vsel %vm62, %v744, 0
  %757 = vmatprep.subr.mxu0 0.0
  %758 = vmatpush1.msra.mxu0 %v746
  %759 = vmatprep.subr.mxu0 0.0
  %760 = vmatpush1.msra.mxu0 %v748
  %761 = vmatprep.subr.mxu0 0.0
  %762 = vmatpush1.msra.mxu0 0.0
  %763 = vmatprep.subr.mxu0 0.0
  %764 = vmatpush1.msra.mxu0 0.0
  %765 = vmatprep.subr.mxu0 0.0
  %766 = vmatpush1.msra.mxu0 0.0
  %767 = vmatprep.subr.mxu0 0.0
  %768 = vmatpush1.msra.mxu0 0.0
  %769 = vmatprep.subr.mxu0 0.0
  %770 = vmatpush1.msra.mxu0 0.0
  %771 = vmatprep.subr.mxu0 0.0
  %772 = vmatpush1.msra.mxu0 0.0
  %773 = vmatprep.subr.mxu0 0.0
  %774 = vmatpush1.msra.mxu0 0.0
  %775 = vmatprep.subr.mxu0 0.0
  %776 = vmatpush1.msra.mxu0 0.0
  %777 = vmatprep.subr.mxu0 0.0
  %778 = vmatpush1.msra.mxu0 0.0
  %779 = vmatprep.subr.mxu0 0.0
  %780 = vmatpush1.msra.mxu0 0.0
  %781 = vmatprep.subr.mxu0 0.0
  %782 = vmatpush1.msra.mxu0 0.0
  %783 = vmatprep.subr.mxu0 0.0
  %784 = vmatpush1.msra.mxu0 0.0
  %785 = vmatprep.subr.mxu0 0.0
  %786 = vmatpush1.msra.mxu0 0.0
  %787 = vmatprep.subr.mxu0 0.0
  %788 = vmatpush1.msra.mxu0 0.0
  %789 = vmatprep.subr.mxu0 0.0
  %790 = vmatpush1.msra.mxu0 0.0
  %791 = vmatprep.subr.mxu0 0.0
  %792 = vmatpush1.msra.mxu0 0.0
  %793 = vmatprep.subr.mxu0 0.0
  %794 = vmatpush1.msra.mxu0 0.0
  %795 = vmatprep.subr.mxu0 0.0
  %796 = vmatpush1.msra.mxu0 0.0
  %797 = vmatprep.subr.mxu0 0.0
  %798 = vmatpush1.msra.mxu0 0.0
  %799 = vmatprep.subr.mxu0 0.0
  %800 = vmatpush1.msra.mxu0 0.0
  %801 = vmatprep.subr.mxu0 0.0
  %802 = vmatpush1.msra.mxu0 0.0
  %803 = vmatprep.subr.mxu0 0.0
  %804 = vmatpush1.msra.mxu0 0.0
  %805 = vmatprep.subr.mxu0 0.0
  %806 = vmatpush1.msra.mxu0 0.0
  %807 = vmatprep.subr.mxu0 0.0
  %808 = vmatpush1.msra.mxu0 0.0
  %809 = vmatprep.subr.mxu0 0.0
  %810 = vmatpush1.msra.mxu0 0.0
  %811 = vmatprep.subr.mxu0 0.0
  %812 = vmatpush1.msra.mxu0 0.0
  %813 = vmatprep.subr.mxu0 0.0
  %814 = vmatpush1.msra.mxu0 0.0
  %815 = vmatprep.subr.mxu0 0.0
  %816 = vmatpush1.msra.mxu0 0.0
  %817 = vmatprep.subr.mxu0 0.0
  %818 = vmatpush1.msra.mxu0 0.0
  %819 = vmatprep.subr.mxu0 0.0
  %820 = vmatpush1.msra.mxu0 0.0
  %821 = vmatprep.mubr.f32.mxu0 0.0
  %822 = vmatmul.mubr.f32.gmra.mrb[0].mxu0 %v752
  %v823 = vpop.f32.mrb[0].mxu0
  %v824 = vadd.f32 0.0, %v823
  %v825 = vpop.f32.mrb[0].mxu0
  %826 = vmatprep.mubr.f32.mxu0 0.0
  %827 = vmatmul.mubr.f32.gmra.mrb[0].mxu0 %v755
  %v828 = vpop.f32.mrb[0].mxu0
  %v829 = vadd.f32 0.0, %v828
  %v830 = vpop.f32.mrb[0].mxu0
  %831 = vdwg.mxu0
  %834 = vrot.lane.b32.xlu0 %v558, 8
  %v835 = vpop.permute.xlu0 %834
  %836 = vrot.lane.b32.xlu0 %v563, 8
  %v837 = vpop.permute.xlu0 %836
  %842 = vrot.lane.b32.xlu0 %v691, 16
  %v843 = vpop.permute.xlu0 %842
  %844 = vrot.lane.b32.xlu0 %v696, 16
  %v845 = vpop.permute.xlu0 %844
  %850 = vrot.lane.b32.xlu0 %v824, 24
  %v851 = vpop.permute.xlu0 %850
  %852 = vrot.lane.b32.xlu0 %v829, 24
  %v853 = vpop.permute.xlu0 %852
  %vm856 = vcmask 64512
  %v857 = vsel %vm856, %v425, %v835
  %v858 = vsel %vm856, %v430, %v837
  %v859 = vsel %vm62, %v857, %v843
  %v860 = vsel %vm62, %v858, %v845
  %vm861 = vcmask 195584
  %v862 = vsel %vm861, %v859, %v851
  %v863 = vsel %vm861, %v860, %v853
  %v864 = vld [vmem:[%s6] sm:$0x1]
  %v866 = vlaneseq
  %v867 = vshrl.u32 %v866, 7
  %v868 = vsub.s32 0, %v867
  %v869 = vrot.slane %v864, %v868
  %v871 = vadd.f32 %v862, %v869
  %v872 = vadd.f32 %v863, %v869
  %v873 = vmax.f32 %v871, 0.0
  %v874 = vmax.f32 %v872, 0.0
  %v875 = vld [vmem:[%s7] sm:$0xff]
  %v876 = vld [vmem:[%s7 + $0x8] sm:$0xff]
  %v877 = vld [vmem:[%s7 + $0x10] sm:$0xff]
  %v878 = vld [vmem:[%s7 + $0x18] sm:$0xff]
  %v880 = vsel %vm149, %v873, 0
  %v883 = vsel %vm149, %v874, 0
  %885 = vmatprep.subr.mxu0 0.0
  %886 = vmatpush1.msra.mxu0 %v875
  %887 = vmatprep.subr.mxu0 0.0
  %888 = vmatpush1.msra.mxu0 %v876
  %889 = vmatprep.subr.mxu0 0.0
  %890 = vmatpush1.msra.mxu0 %v877
  %891 = vmatprep.subr.mxu0 0.0
  %892 = vmatpush1.msra.mxu0 %v878
  %893 = vmatprep.subr.mxu0 0.0
  %894 = vmatpush1.msra.mxu0 0.0
  %895 = vmatprep.subr.mxu0 0.0
  %896 = vmatpush1.msra.mxu0 0.0
  %897 = vmatprep.subr.mxu0 0.0
  %898 = vmatpush1.msra.mxu0 0.0
  %899 = vmatprep.subr.mxu0 0.0
  %900 = vmatpush1.msra.mxu0 0.0
  %901 = vmatprep.subr.mxu0 0.0
  %902 = vmatpush1.msra.mxu0 0.0
  %903 = vmatprep.subr.mxu0 0.0
  %904 = vmatpush1.msra.mxu0 0.0
  %905 = vmatprep.subr.mxu0 0.0
  %906 = vmatpush1.msra.mxu0 0.0
  %907 = vmatprep.subr.mxu0 0.0
  %908 = vmatpush1.msra.mxu0 0.0
  %909 = vmatprep.subr.mxu0 0.0
  %910 = vmatpush1.msra.mxu0 0.0
  %911 = vmatprep.subr.mxu0 0.0
  %912 = vmatpush1.msra.mxu0 0.0
  %913 = vmatprep.subr.mxu0 0.0
  %914 = vmatpush1.msra.mxu0 0.0
  %915 = vmatprep.subr.mxu0 0.0
  %916 = vmatpush1.msra.mxu0 0.0
  %917 = vmatprep.subr.mxu0 0.0
  %918 = vmatpush1.msra.mxu0 0.0
  %919 = vmatprep.subr.mxu0 0.0
  %920 = vmatpush1.msra.mxu0 0.0
  %921 = vmatprep.subr.mxu0 0.0
  %922 = vmatpush1.msra.mxu0 0.0
  %923 = vmatprep.subr.mxu0 0.0
  %924 = vmatpush1.msra.mxu0 0.0
  %925 = vmatprep.subr.mxu0 0.0
  %926 = vmatpush1.msra.mxu0 0.0
  %927 = vmatprep.subr.mxu0 0.0
  %928 = vmatpush1.msra.mxu0 0.0
  %929 = vmatprep.subr.mxu0 0.0
  %930 = vmatpush1.msra.mxu0 0.0
  %931 = vmatprep.subr.mxu0 0.0
  %932 = vmatpush1.msra.mxu0 0.0
  %933 = vmatprep.subr.mxu0 0.0
  %934 = vmatpush1.msra.mxu0 0.0
  %935 = vmatprep.subr.mxu0 0.0
  %936 = vmatpush1.msra.mxu0 0.0
  %937 = vmatprep.subr.mxu0 0.0
  %938 = vmatpush1.msra.mxu0 0.0
  %939 = vmatprep.subr.mxu0 0.0
  %940 = vmatpush1.msra.mxu0 0.0
  %941 = vmatprep.subr.mxu0 0.0
  %942 = vmatpush1.msra.mxu0 0.0
  %943 = vmatprep.subr.mxu0 0.0
  %944 = vmatpush1.msra.mxu0 0.0
  %945 = vmatprep.subr.mxu0 0.0
  %946 = vmatpush1.msra.mxu0 0.0
  %947 = vmatprep.subr.mxu0 0.0
  %948 = vmatpush1.msra.mxu0 0.0
  %949 = vmatprep.mubr.f32.mxu0 0.0
  %950 = vmatmul.mubr.f32.gmra.mrb[0].mxu0 %v880
  %v951 = vpop.f32.mrb[0].mxu0
  %v952 = vadd.f32 0.0, %v951
  %v953 = vpop.f32.mrb[0].mxu0
  %954 = vmatprep.mubr.f32.mxu0 0.0
  %955 = vmatmul.mubr.f32.gmra.mrb[0].mxu0 %v883
  %v956 = vpop.f32.mrb[0].mxu0
  %v957 = vadd.f32 0.0, %v956
  %v958 = vpop.f32.mrb[0].mxu0
  %959 = vdwg.mxu0
  %v960 = vld [vmem:[%s8] sm:$0xf]
  %v961 = vld [vmem:[%s9] sm:$0xff]
  %v962 = vld [vmem:[%s9 + $0x8] sm:$0xff]
  %v963 = vld [vmem:[%s9 + $0x10] sm:$0xff]
  %v964 = vld [vmem:[%s9 + $0x18] sm:$0xff]
  %v965 = vld [vmem:[%s9 + $0x20] sm:$0xff]
  %v966 = vld [vmem:[%s9 + $0x28] sm:$0xff]
  %v967 = vld [vmem:[%s9 + $0x30] sm:$0xff]
  %v968 = vld [vmem:[%s9 + $0x38] sm:$0xff]
  %vm969 = vcmask 523264
  %v971 = vsel %vm969, %v952, 0
  %v974 = vsel %vm969, %v957, 0
  %976 = vmatprep.subr.mxu0 0.0
  %977 = vmatpush1.msra.mxu0 %v961
  %978 = vmatprep.subr.mxu0 0.0
  %979 = vmatpush1.msra.mxu0 %v962
  %980 = vmatprep.subr.mxu0 0.0
  %981 = vmatpush1.msra.mxu0 %v963
  %982 = vmatprep.subr.mxu0 0.0
  %983 = vmatpush1.msra.mxu0 %v964
  %984 = vmatprep.subr.mxu0 0.0
  %985 = vmatpush1.msra.mxu0 %v965
  %986 = vmatprep.subr.mxu0 0.0
  %987 = vmatpush1.msra.mxu0 %v966
  %988 = vmatprep.subr.mxu0 0.0
  %989 = vmatpush1.msra.mxu0 %v967
  %990 = vmatprep.subr.mxu0 0.0
  %991 = vmatpush1.msra.mxu0 %v968
  %992 = vmatprep.subr.mxu0 0.0
  %993 = vmatpush1.msra.mxu0 0.0
  %994 = vmatprep.subr.mxu0 0.0
  %995 = vmatpush1.msra.mxu0 0.0
  %996 = vmatprep.subr.mxu0 0.0
  %997 = vmatpush1.msra.mxu0 0.0
  %998 = vmatprep.subr.mxu0 0.0
  %999 = vmatpush1.msra.mxu0 0.0
  %1000 = vmatprep.subr.mxu0 0.0
  %1001 = vmatpush1.msra.mxu0 0.0
  %1002 = vmatprep.subr.mxu0 0.0
  %1003 = vmatpush1.msra.mxu0 0.0
  %1004 = vmatprep.subr.mxu0 0.0
  %1005 = vmatpush1.msra.mxu0 0.0
  %1006 = vmatprep.subr.mxu0 0.0
  %1007 = vmatpush1.msra.mxu0 0.0
  %1008 = vmatprep.subr.mxu0 0.0
  %1009 = vmatpush1.msra.mxu0 0.0
  %1010 = vmatprep.subr.mxu0 0.0
  %1011 = vmatpush1.msra.mxu0 0.0
  %1012 = vmatprep.subr.mxu0 0.0
  %1013 = vmatpush1.msra.mxu0 0.0
  %1014 = vmatprep.subr.mxu0 0.0
  %1015 = vmatpush1.msra.mxu0 0.0
  %1016 = vmatprep.subr.mxu0 0.0
  %1017 = vmatpush1.msra.mxu0 0.0
  %1018 = vmatprep.subr.mxu0 0.0
  %1019 = vmatpush1.msra.mxu0 0.0
  %1020 = vmatprep.subr.mxu0 0.0
  %1021 = vmatpush1.msra.mxu0 0.0
  %1022 = vmatprep.subr.mxu0 0.0
  %1023 = vmatpush1.msra.mxu0 0.0
  %1024 = vmatprep.subr.mxu0 0.0
  %1025 = vmatpush1.msra.mxu0 0.0
  %1026 = vmatprep.subr.mxu0 0.0
  %1027 = vmatpush1.msra.mxu0 0.0
  %1028 = vmatprep.subr.mxu0 0.0
  %1029 = vmatpush1.msra.mxu0 0.0
  %1030 = vmatprep.subr.mxu0 0.0
  %1031 = vmatpush1.msra.mxu0 0.0
  %1032 = vmatprep.subr.mxu0 0.0
  %1033 = vmatpush1.msra.mxu0 0.0
  %1034 = vmatprep.subr.mxu0 0.0
  %1035 = vmatpush1.msra.mxu0 0.0
  %1036 = vmatprep.subr.mxu0 0.0
  %1037 = vmatpush1.msra.mxu0 0.0
  %1038 = vmatprep.subr.mxu0 0.0
  %1039 = vmatpush1.msra.mxu0 0.0
  %1040 = vmatprep.mubr.f32.mxu0 0.0
  %1041 = vmatmul.mubr.f32.gmra.mrb[0].mxu0 %v971
  %v1042 = vpop.f32.mrb[0].mxu0
  %v1043 = vadd.f32 0.0, %v1042
  %v1044 = vpop.f32.mrb[0].mxu0
  %1045 = vmatprep.mubr.f32.mxu0 0.0
  %1046 = vmatmul.mubr.f32.gmra.mrb[0].mxu0 %v974
  %v1047 = vpop.f32.mrb[0].mxu0
  %v1048 = vadd.f32 0.0, %v1047
  %v1049 = vpop.f32.mrb[0].mxu0
  %1050 = vdwg.mxu0
  %v1052 = vsel %vm969, %v960, 0
  %1054 = vmatprep.subr.mxu0 0.0
  %1055 = vmatpush1.xpose.msra.mxu0 %v971
  %1056 = vmatprep.subr.mxu0 0.0
  %1057 = vmatpush1.xpose.msra.mxu0 %v974
  %1058 = vmatprep.subr.mxu0 0.0
  %1059 = vmatpush1.xpose.msra.mxu0 0.0
  %1060 = vmatprep.subr.mxu0 0.0
  %1061 = vmatpush1.xpose.msra.mxu0 0.0
  %1062 = vmatprep.subr.mxu0 0.0
  %1063 = vmatpush1.xpose.msra.mxu0 0.0
  %1064 = vmatprep.subr.mxu0 0.0
  %1065 = vmatpush1.xpose.msra.mxu0 0.0
  %1066 = vmatprep.subr.mxu0 0.0
  %1067 = vmatpush1.xpose.msra.mxu0 0.0
  %1068 = vmatprep.subr.mxu0 0.0
  %1069 = vmatpush1.xpose.msra.mxu0 0.0
  %1070 = vmatprep.subr.mxu0 0.0
  %1071 = vmatpush1.xpose.msra.mxu0 0.0
  %1072 = vmatprep.subr.mxu0 0.0
  %1073 = vmatpush1.xpose.msra.mxu0 0.0
  %1074 = vmatprep.subr.mxu0 0.0
  %1075 = vmatpush1.xpose.msra.mxu0 0.0
  %1076 = vmatprep.subr.mxu0 0.0
  %1077 = vmatpush1.xpose.msra.mxu0 0.0
  %1078 = vmatprep.subr.mxu0 0.0
  %1079 = vmatpush1.xpose.msra.mxu0 0.0
  %1080 = vmatprep.subr.mxu0 0.0
  %1081 = vmatpush1.xpose.msra.mxu0 0.0
  %1082 = vmatprep.subr.mxu0 0.0
  %1083 = vmatpush1.xpose.msra.mxu0 0.0
  %1084 = vmatprep.subr.mxu0 0.0
  %1085 = vmatpush1.xpose.msra.mxu0 0.0
  %1086 = vmatprep.subr.mxu0 0.0
  %1087 = vmatpush1.xpose.msra.mxu0 0.0
  %1088 = vmatprep.subr.mxu0 0.0
  %1089 = vmatpush1.xpose.msra.mxu0 0.0
  %1090 = vmatprep.subr.mxu0 0.0
  %1091 = vmatpush1.xpose.msra.mxu0 0.0
  %1092 = vmatprep.subr.mxu0 0.0
  %1093 = vmatpush1.xpose.msra.mxu0 0.0
  %1094 = vmatprep.subr.mxu0 0.0
  %1095 = vmatpush1.xpose.msra.mxu0 0.0
  %1096 = vmatprep.subr.mxu0 0.0
  %1097 = vmatpush1.xpose.msra.mxu0 0.0
  %1098 = vmatprep.subr.mxu0 0.0
  %1099 = vmatpush1.xpose.msra.mxu0 0.0
  %1100 = vmatprep.subr.mxu0 0.0
  %1101 = vmatpush1.xpose.msra.mxu0 0.0
  %1102 = vmatprep.subr.mxu0 0.0
  %1103 = vmatpush1.xpose.msra.mxu0 0.0
  %1104 = vmatprep.subr.mxu0 0.0
  %1105 = vmatpush1.xpose.msra.mxu0 0.0
  %1106 = vmatprep.subr.mxu0 0.0
  %1107 = vmatpush1.xpose.msra.mxu0 0.0
  %1108 = vmatprep.subr.mxu0 0.0
  %1109 = vmatpush1.xpose.msra.mxu0 0.0
  %1110 = vmatprep.subr.mxu0 0.0
  %1111 = vmatpush1.xpose.msra.mxu0 0.0
  %1112 = vmatprep.subr.mxu0 0.0
  %1113 = vmatpush1.xpose.msra.mxu0 0.0
  %1114 = vmatprep.subr.mxu0 0.0
  %1115 = vmatpush1.xpose.msra.mxu0 0.0
  %1116 = vmatprep.subr.mxu0 0.0
  %1117 = vmatpush1.xpose.msra.mxu0 0.0
  %1118 = vmatprep.mubr.f32.mxu0 0.0
  %1119 = vmatmul.mubr.f32.gmra.mrb[0].mxu0 %v1052
  %v1120 = vpop.f32.mrb[0].mxu0
  %v1121 = vadd.f32 0.0, %v1120
  %v1122 = vpop.f32.mrb[0].mxu0
  %1123 = vdwg.mxu0
  %1125 = vset.pattern.permute.xlu0 0
  %1126 = vperm.xlu0 %1125, %v1043
  %v1127 = vpop.permute.xlu0 %1126
  %1130 = vset.pattern.permute.xlu0 0
  %1131 = vperm.xlu0 %1130, %v1048
  %v1132 = vpop.permute.xlu0 %1131
  %v1134 = vlaneseq
  %v1135 = vshrl.u32 %v1134, 7
  %v1136 = vsub.s32 0, %v1135
  %v1137 = vrot.slane %v1121, %v1136
  %v1138 = vadd.f32 %v1127, %v1137
  %v1139 = vadd.f32 %v1132, %v1137
  %vm1140 = vcmp.gt.f32.partialorder %v1138, 0.0
  %vm1141 = vcmp.gt.f32.partialorder %v1139, 0.0
  %v1142 = vmul.f32 %v1138, 0.2
  %v1143 = vmul.f32 %v1139, 0.2
  %v1144 = vsel %vm1140, %v1138, %v1142
  %v1145 = vsel %vm1141, %v1139, %v1143
  %v1146 = vadd.f32 %v1144, %v58
  %v1147 = vadd.f32 %v1145, %v59
  %v1148 = vsel %vm62, %v1146, -inf
  %1149 = vmax.xlane.f32.xlu0 %v1148
  %v1150 = vpop.xlane.xlu0 %1149
  %v1151 = vsel %vm62, %v1147, -inf
  %1152 = vmax.xlane.f32.xlu0 %v1151
  %v1153 = vpop.xlane.xlu0 %1152
  %v1154 = vsub.f32 %v1146, %v1150
  %v1155 = vsub.f32 %v1147, %v1153
  %v1156 = vmul.f32 %v1154, 1.442695
  %v1157 = vpow.pop %v1156
  %v1158 = vmul.f32 %v1155, 1.442695
  %v1159 = vpow.pop %v1158
  %v1160 = vsel %vm62, %v1157, 0.0
  %1161 = vadd.xlane.f32.xlu0 %v1160
  %v1162 = vpop.xlane.xlu0 %1161
  %v1163 = vsel %vm62, %v1159, 0.0
  %1164 = vadd.xlane.f32.xlu0 %v1163
  %v1165 = vpop.xlane.xlu0 %1164
  %v1166 = vmax.f32 %v1162, 1e-20
  %v1167 = vmax.f32 %v1165, 1e-20
  %v1168 = vrcp.pop %v1166
  %v1169 = vmul.f32 %v1157, %v1168
  %v1170 = vrcp.pop %v1167
  %v1171 = vmul.f32 %v1159, %v1170
  %1172 = vset.pattern.permute.xlu0 1
  %1173 = vperm.xlu0 %1172, %v1043
  %v1174 = vpop.permute.xlu0 %1173
  %1176 = vset.pattern.permute.xlu0 1
  %1177 = vperm.xlu0 %1176, %v1048
  %v1178 = vpop.permute.xlu0 %1177
  %v1180 = vlaneseq
  %v1181 = vshrl.u32 %v1180, 7
  %v1182 = vsub.s32 1, %v1181
  %v1183 = vrot.slane %v1121, %v1182
  %v1184 = vadd.f32 %v1174, %v1183
  %v1185 = vadd.f32 %v1178, %v1183
  %vm1186 = vcmp.gt.f32.partialorder %v1184, 0.0
  %vm1187 = vcmp.gt.f32.partialorder %v1185, 0.0
  %v1188 = vmul.f32 %v1184, 0.2
  %v1189 = vmul.f32 %v1185, 0.2
  %v1190 = vsel %vm1186, %v1184, %v1188
  %v1191 = vsel %vm1187, %v1185, %v1189
  %v1192 = vadd.f32 %v1190, %v58
  %v1193 = vadd.f32 %v1191, %v59
  %v1194 = vsel %vm62, %v1192, -inf
  %1195 = vmax.xlane.f32.xlu0 %v1194
  %v1196 = vpop.xlane.xlu0 %1195
  %v1197 = vsel %vm62, %v1193, -inf
  %1198 = vmax.xlane.f32.xlu0 %v1197
  %v1199 = vpop.xlane.xlu0 %1198
  %v1200 = vsub.f32 %v1192, %v1196
  %v1201 = vsub.f32 %v1193, %v1199
  %v1202 = vmul.f32 %v1200, 1.442695
  %v1203 = vpow.pop %v1202
  %v1204 = vmul.f32 %v1201, 1.442695
  %v1205 = vpow.pop %v1204
  %v1206 = vsel %vm62, %v1203, 0.0
  %1207 = vadd.xlane.f32.xlu0 %v1206
  %v1208 = vpop.xlane.xlu0 %1207
  %v1209 = vsel %vm62, %v1205, 0.0
  %1210 = vadd.xlane.f32.xlu0 %v1209
  %v1211 = vpop.xlane.xlu0 %1210
  %v1212 = vmax.f32 %v1208, 1e-20
  %v1213 = vmax.f32 %v1211, 1e-20
  %v1214 = vrcp.pop %v1212
  %v1215 = vmul.f32 %v1203, %v1214
  %v1216 = vrcp.pop %v1213
  %v1217 = vmul.f32 %v1205, %v1216
  %1218 = vrot.lane.b32.xlu0 %v952, 112
  %v1219 = vpop.permute.xlu0 %1218
  %1220 = vrot.lane.b32.xlu0 %v957, 112
  %v1221 = vpop.permute.xlu0 %1220
  %v1225 = vsel %vm62, %v1215, 0
  %v1228 = vsel %vm62, %v1217, 0
  %1230 = vmatprep.subr.mxu0 0.0
  %1231 = vmatpush1.msra.mxu0 %v1219
  %1232 = vmatprep.subr.mxu0 0.0
  %1233 = vmatpush1.msra.mxu0 %v1221
  %1234 = vmatprep.subr.mxu0 0.0
  %1235 = vmatpush1.msra.mxu0 0.0
  %1236 = vmatprep.subr.mxu0 0.0
  %1237 = vmatpush1.msra.mxu0 0.0
  %1238 = vmatprep.subr.mxu0 0.0
  %1239 = vmatpush1.msra.mxu0 0.0
  %1240 = vmatprep.subr.mxu0 0.0
  %1241 = vmatpush1.msra.mxu0 0.0
  %1242 = vmatprep.subr.mxu0 0.0
  %1243 = vmatpush1.msra.mxu0 0.0
  %1244 = vmatprep.subr.mxu0 0.0
  %1245 = vmatpush1.msra.mxu0 0.0
  %1246 = vmatprep.subr.mxu0 0.0
  %1247 = vmatpush1.msra.mxu0 0.0
  %1248 = vmatprep.subr.mxu0 0.0
  %1249 = vmatpush1.msra.mxu0 0.0
  %1250 = vmatprep.subr.mxu0 0.0
  %1251 = vmatpush1.msra.mxu0 0.0
  %1252 = vmatprep.subr.mxu0 0.0
  %1253 = vmatpush1.msra.mxu0 0.0
  %1254 = vmatprep.subr.mxu0 0.0
  %1255 = vmatpush1.msra.mxu0 0.0
  %1256 = vmatprep.subr.mxu0 0.0
  %1257 = vmatpush1.msra.mxu0 0.0
  %1258 = vmatprep.subr.mxu0 0.0
  %1259 = vmatpush1.msra.mxu0 0.0
  %1260 = vmatprep.subr.mxu0 0.0
  %1261 = vmatpush1.msra.mxu0 0.0
  %1262 = vmatprep.subr.mxu0 0.0
  %1263 = vmatpush1.msra.mxu0 0.0
  %1264 = vmatprep.subr.mxu0 0.0
  %1265 = vmatpush1.msra.mxu0 0.0
  %1266 = vmatprep.subr.mxu0 0.0
  %1267 = vmatpush1.msra.mxu0 0.0
  %1268 = vmatprep.subr.mxu0 0.0
  %1269 = vmatpush1.msra.mxu0 0.0
  %1270 = vmatprep.subr.mxu0 0.0
  %1271 = vmatpush1.msra.mxu0 0.0
  %1272 = vmatprep.subr.mxu0 0.0
  %1273 = vmatpush1.msra.mxu0 0.0
  %1274 = vmatprep.subr.mxu0 0.0
  %1275 = vmatpush1.msra.mxu0 0.0
  %1276 = vmatprep.subr.mxu0 0.0
  %1277 = vmatpush1.msra.mxu0 0.0
  %1278 = vmatprep.subr.mxu0 0.0
  %1279 = vmatpush1.msra.mxu0 0.0
  %1280 = vmatprep.subr.mxu0 0.0
  %1281 = vmatpush1.msra.mxu0 0.0
  %1282 = vmatprep.subr.mxu0 0.0
  %1283 = vmatpush1.msra.mxu0 0.0
  %1284 = vmatprep.subr.mxu0 0.0
  %1285 = vmatpush1.msra.mxu0 0.0
  %1286 = vmatprep.subr.mxu0 0.0
  %1287 = vmatpush1.msra.mxu0 0.0
  %1288 = vmatprep.subr.mxu0 0.0
  %1289 = vmatpush1.msra.mxu0 0.0
  %1290 = vmatprep.subr.mxu0 0.0
  %1291 = vmatpush1.msra.mxu0 0.0
  %1292 = vmatprep.subr.mxu0 0.0
  %1293 = vmatpush1.msra.mxu0 0.0
  %1294 = vmatprep.mubr.f32.mxu0 0.0
  %1295 = vmatmul.mubr.f32.gmra.mrb[0].mxu0 %v1225
  %v1296 = vpop.f32.mrb[0].mxu0
  %v1297 = vadd.f32 0.0, %v1296
  %v1298 = vpop.f32.mrb[0].mxu0
  %1299 = vmatprep.mubr.f32.mxu0 0.0
  %1300 = vmatmul.mubr.f32.gmra.mrb[0].mxu0 %v1228
  %v1301 = vpop.f32.mrb[0].mxu0
  %v1302 = vadd.f32 0.0, %v1301
  %v1303 = vpop.f32.mrb[0].mxu0
  %1304 = vdwg.mxu0
  %1305 = vset.pattern.permute.xlu0 2
  %1306 = vperm.xlu0 %1305, %v1043
  %v1307 = vpop.permute.xlu0 %1306
  %1309 = vset.pattern.permute.xlu0 2
  %1310 = vperm.xlu0 %1309, %v1048
  %v1311 = vpop.permute.xlu0 %1310
  %v1313 = vlaneseq
  %v1314 = vshrl.u32 %v1313, 7
  %v1315 = vsub.s32 2, %v1314
  %v1316 = vrot.slane %v1121, %v1315
  %v1317 = vadd.f32 %v1307, %v1316
  %v1318 = vadd.f32 %v1311, %v1316
  %vm1319 = vcmp.gt.f32.partialorder %v1317, 0.0
  %vm1320 = vcmp.gt.f32.partialorder %v1318, 0.0
  %v1321 = vmul.f32 %v1317, 0.2
  %v1322 = vmul.f32 %v1318, 0.2
  %v1323 = vsel %vm1319, %v1317, %v1321
  %v1324 = vsel %vm1320, %v1318, %v1322
  %v1325 = vadd.f32 %v1323, %v58
  %v1326 = vadd.f32 %v1324, %v59
  %v1327 = vsel %vm62, %v1325, -inf
  %1328 = vmax.xlane.f32.xlu0 %v1327
  %v1329 = vpop.xlane.xlu0 %1328
  %v1330 = vsel %vm62, %v1326, -inf
  %1331 = vmax.xlane.f32.xlu0 %v1330
  %v1332 = vpop.xlane.xlu0 %1331
  %v1333 = vsub.f32 %v1325, %v1329
  %v1334 = vsub.f32 %v1326, %v1332
  %v1335 = vmul.f32 %v1333, 1.442695
  %v1336 = vpow.pop %v1335
  %v1337 = vmul.f32 %v1334, 1.442695
  %v1338 = vpow.pop %v1337
  %v1339 = vsel %vm62, %v1336, 0.0
  %1340 = vadd.xlane.f32.xlu0 %v1339
  %v1341 = vpop.xlane.xlu0 %1340
  %v1342 = vsel %vm62, %v1338, 0.0
  %1343 = vadd.xlane.f32.xlu0 %v1342
  %v1344 = vpop.xlane.xlu0 %1343
  %v1345 = vmax.f32 %v1341, 1e-20
  %v1346 = vmax.f32 %v1344, 1e-20
  %v1347 = vrcp.pop %v1345
  %v1348 = vmul.f32 %v1336, %v1347
  %v1349 = vrcp.pop %v1346
  %v1350 = vmul.f32 %v1338, %v1349
  %1351 = vrot.lane.b32.xlu0 %v952, 96
  %v1352 = vpop.permute.xlu0 %1351
  %1353 = vrot.lane.b32.xlu0 %v957, 96
  %v1354 = vpop.permute.xlu0 %1353
  %v1358 = vsel %vm62, %v1348, 0
  %v1361 = vsel %vm62, %v1350, 0
  %1363 = vmatprep.subr.mxu0 0.0
  %1364 = vmatpush1.msra.mxu0 %v1352
  %1365 = vmatprep.subr.mxu0 0.0
  %1366 = vmatpush1.msra.mxu0 %v1354
  %1367 = vmatprep.subr.mxu0 0.0
  %1368 = vmatpush1.msra.mxu0 0.0
  %1369 = vmatprep.subr.mxu0 0.0
  %1370 = vmatpush1.msra.mxu0 0.0
  %1371 = vmatprep.subr.mxu0 0.0
  %1372 = vmatpush1.msra.mxu0 0.0
  %1373 = vmatprep.subr.mxu0 0.0
  %1374 = vmatpush1.msra.mxu0 0.0
  %1375 = vmatprep.subr.mxu0 0.0
  %1376 = vmatpush1.msra.mxu0 0.0
  %1377 = vmatprep.subr.mxu0 0.0
  %1378 = vmatpush1.msra.mxu0 0.0
  %1379 = vmatprep.subr.mxu0 0.0
  %1380 = vmatpush1.msra.mxu0 0.0
  %1381 = vmatprep.subr.mxu0 0.0
  %1382 = vmatpush1.msra.mxu0 0.0
  %1383 = vmatprep.subr.mxu0 0.0
  %1384 = vmatpush1.msra.mxu0 0.0
  %1385 = vmatprep.subr.mxu0 0.0
  %1386 = vmatpush1.msra.mxu0 0.0
  %1387 = vmatprep.subr.mxu0 0.0
  %1388 = vmatpush1.msra.mxu0 0.0
  %1389 = vmatprep.subr.mxu0 0.0
  %1390 = vmatpush1.msra.mxu0 0.0
  %1391 = vmatprep.subr.mxu0 0.0
  %1392 = vmatpush1.msra.mxu0 0.0
  %1393 = vmatprep.subr.mxu0 0.0
  %1394 = vmatpush1.msra.mxu0 0.0
  %1395 = vmatprep.subr.mxu0 0.0
  %1396 = vmatpush1.msra.mxu0 0.0
  %1397 = vmatprep.subr.mxu0 0.0
  %1398 = vmatpush1.msra.mxu0 0.0
  %1399 = vmatprep.subr.mxu0 0.0
  %1400 = vmatpush1.msra.mxu0 0.0
  %1401 = vmatprep.subr.mxu0 0.0
  %1402 = vmatpush1.msra.mxu0 0.0
  %1403 = vmatprep.subr.mxu0 0.0
  %1404 = vmatpush1.msra.mxu0 0.0
  %1405 = vmatprep.subr.mxu0 0.0
  %1406 = vmatpush1.msra.mxu0 0.0
  %1407 = vmatprep.subr.mxu0 0.0
  %1408 = vmatpush1.msra.mxu0 0.0
  %1409 = vmatprep.subr.mxu0 0.0
  %1410 = vmatpush1.msra.mxu0 0.0
  %1411 = vmatprep.subr.mxu0 0.0
  %1412 = vmatpush1.msra.mxu0 0.0
  %1413 = vmatprep.subr.mxu0 0.0
  %1414 = vmatpush1.msra.mxu0 0.0
  %1415 = vmatprep.subr.mxu0 0.0
  %1416 = vmatpush1.msra.mxu0 0.0
  %1417 = vmatprep.subr.mxu0 0.0
  %1418 = vmatpush1.msra.mxu0 0.0
  %1419 = vmatprep.subr.mxu0 0.0
  %1420 = vmatpush1.msra.mxu0 0.0
  %1421 = vmatprep.subr.mxu0 0.0
  %1422 = vmatpush1.msra.mxu0 0.0
  %1423 = vmatprep.subr.mxu0 0.0
  %1424 = vmatpush1.msra.mxu0 0.0
  %1425 = vmatprep.subr.mxu0 0.0
  %1426 = vmatpush1.msra.mxu0 0.0
  %1427 = vmatprep.mubr.f32.mxu0 0.0
  %1428 = vmatmul.mubr.f32.gmra.mrb[0].mxu0 %v1358
  %v1429 = vpop.f32.mrb[0].mxu0
  %v1430 = vadd.f32 0.0, %v1429
  %v1431 = vpop.f32.mrb[0].mxu0
  %1432 = vmatprep.mubr.f32.mxu0 0.0
  %1433 = vmatmul.mubr.f32.gmra.mrb[0].mxu0 %v1361
  %v1434 = vpop.f32.mrb[0].mxu0
  %v1435 = vadd.f32 0.0, %v1434
  %v1436 = vpop.f32.mrb[0].mxu0
  %1437 = vdwg.mxu0
  %1438 = vset.pattern.permute.xlu0 3
  %1439 = vperm.xlu0 %1438, %v1043
  %v1440 = vpop.permute.xlu0 %1439
  %1442 = vset.pattern.permute.xlu0 3
  %1443 = vperm.xlu0 %1442, %v1048
  %v1444 = vpop.permute.xlu0 %1443
  %v1446 = vlaneseq
  %v1447 = vshrl.u32 %v1446, 7
  %v1448 = vsub.s32 3, %v1447
  %v1449 = vrot.slane %v1121, %v1448
  %v1450 = vadd.f32 %v1440, %v1449
  %v1451 = vadd.f32 %v1444, %v1449
  %vm1452 = vcmp.gt.f32.partialorder %v1450, 0.0
  %vm1453 = vcmp.gt.f32.partialorder %v1451, 0.0
  %v1454 = vmul.f32 %v1450, 0.2
  %v1455 = vmul.f32 %v1451, 0.2
  %v1456 = vsel %vm1452, %v1450, %v1454
  %v1457 = vsel %vm1453, %v1451, %v1455
  %v1458 = vadd.f32 %v1456, %v58
  %v1459 = vadd.f32 %v1457, %v59
  %v1460 = vsel %vm62, %v1458, -inf
  %1461 = vmax.xlane.f32.xlu0 %v1460
  %v1462 = vpop.xlane.xlu0 %1461
  %v1463 = vsel %vm62, %v1459, -inf
  %1464 = vmax.xlane.f32.xlu0 %v1463
  %v1465 = vpop.xlane.xlu0 %1464
  %v1466 = vsub.f32 %v1458, %v1462
  %v1467 = vsub.f32 %v1459, %v1465
  %v1468 = vmul.f32 %v1466, 1.442695
  %v1469 = vpow.pop %v1468
  %v1470 = vmul.f32 %v1467, 1.442695
  %v1471 = vpow.pop %v1470
  %v1472 = vsel %vm62, %v1469, 0.0
  %1473 = vadd.xlane.f32.xlu0 %v1472
  %v1474 = vpop.xlane.xlu0 %1473
  %v1475 = vsel %vm62, %v1471, 0.0
  %1476 = vadd.xlane.f32.xlu0 %v1475
  %v1477 = vpop.xlane.xlu0 %1476
  %v1478 = vmax.f32 %v1474, 1e-20
  %v1479 = vmax.f32 %v1477, 1e-20
  %v1480 = vrcp.pop %v1478
  %v1481 = vmul.f32 %v1469, %v1480
  %v1482 = vrcp.pop %v1479
  %v1483 = vmul.f32 %v1471, %v1482
  %1484 = vrot.lane.b32.xlu0 %v952, 80
  %v1485 = vpop.permute.xlu0 %1484
  %1486 = vrot.lane.b32.xlu0 %v957, 80
  %v1487 = vpop.permute.xlu0 %1486
  %v1491 = vsel %vm62, %v1481, 0
  %v1494 = vsel %vm62, %v1483, 0
  %1496 = vmatprep.subr.mxu0 0.0
  %1497 = vmatpush1.msra.mxu0 %v1485
  %1498 = vmatprep.subr.mxu0 0.0
  %1499 = vmatpush1.msra.mxu0 %v1487
  %1500 = vmatprep.subr.mxu0 0.0
  %1501 = vmatpush1.msra.mxu0 0.0
  %1502 = vmatprep.subr.mxu0 0.0
  %1503 = vmatpush1.msra.mxu0 0.0
  %1504 = vmatprep.subr.mxu0 0.0
  %1505 = vmatpush1.msra.mxu0 0.0
  %1506 = vmatprep.subr.mxu0 0.0
  %1507 = vmatpush1.msra.mxu0 0.0
  %1508 = vmatprep.subr.mxu0 0.0
  %1509 = vmatpush1.msra.mxu0 0.0
  %1510 = vmatprep.subr.mxu0 0.0
  %1511 = vmatpush1.msra.mxu0 0.0
  %1512 = vmatprep.subr.mxu0 0.0
  %1513 = vmatpush1.msra.mxu0 0.0
  %1514 = vmatprep.subr.mxu0 0.0
  %1515 = vmatpush1.msra.mxu0 0.0
  %1516 = vmatprep.subr.mxu0 0.0
  %1517 = vmatpush1.msra.mxu0 0.0
  %1518 = vmatprep.subr.mxu0 0.0
  %1519 = vmatpush1.msra.mxu0 0.0
  %1520 = vmatprep.subr.mxu0 0.0
  %1521 = vmatpush1.msra.mxu0 0.0
  %1522 = vmatprep.subr.mxu0 0.0
  %1523 = vmatpush1.msra.mxu0 0.0
  %1524 = vmatprep.subr.mxu0 0.0
  %1525 = vmatpush1.msra.mxu0 0.0
  %1526 = vmatprep.subr.mxu0 0.0
  %1527 = vmatpush1.msra.mxu0 0.0
  %1528 = vmatprep.subr.mxu0 0.0
  %1529 = vmatpush1.msra.mxu0 0.0
  %1530 = vmatprep.subr.mxu0 0.0
  %1531 = vmatpush1.msra.mxu0 0.0
  %1532 = vmatprep.subr.mxu0 0.0
  %1533 = vmatpush1.msra.mxu0 0.0
  %1534 = vmatprep.subr.mxu0 0.0
  %1535 = vmatpush1.msra.mxu0 0.0
  %1536 = vmatprep.subr.mxu0 0.0
  %1537 = vmatpush1.msra.mxu0 0.0
  %1538 = vmatprep.subr.mxu0 0.0
  %1539 = vmatpush1.msra.mxu0 0.0
  %1540 = vmatprep.subr.mxu0 0.0
  %1541 = vmatpush1.msra.mxu0 0.0
  %1542 = vmatprep.subr.mxu0 0.0
  %1543 = vmatpush1.msra.mxu0 0.0
  %1544 = vmatprep.subr.mxu0 0.0
  %1545 = vmatpush1.msra.mxu0 0.0
  %1546 = vmatprep.subr.mxu0 0.0
  %1547 = vmatpush1.msra.mxu0 0.0
  %1548 = vmatprep.subr.mxu0 0.0
  %1549 = vmatpush1.msra.mxu0 0.0
  %1550 = vmatprep.subr.mxu0 0.0
  %1551 = vmatpush1.msra.mxu0 0.0
  %1552 = vmatprep.subr.mxu0 0.0
  %1553 = vmatpush1.msra.mxu0 0.0
  %1554 = vmatprep.subr.mxu0 0.0
  %1555 = vmatpush1.msra.mxu0 0.0
  %1556 = vmatprep.subr.mxu0 0.0
  %1557 = vmatpush1.msra.mxu0 0.0
  %1558 = vmatprep.subr.mxu0 0.0
  %1559 = vmatpush1.msra.mxu0 0.0
  %1560 = vmatprep.mubr.f32.mxu0 0.0
  %1561 = vmatmul.mubr.f32.gmra.mrb[0].mxu0 %v1491
  %v1562 = vpop.f32.mrb[0].mxu0
  %v1563 = vadd.f32 0.0, %v1562
  %v1564 = vpop.f32.mrb[0].mxu0
  %1565 = vmatprep.mubr.f32.mxu0 0.0
  %1566 = vmatmul.mubr.f32.gmra.mrb[0].mxu0 %v1494
  %v1567 = vpop.f32.mrb[0].mxu0
  %v1568 = vadd.f32 0.0, %v1567
  %v1569 = vpop.f32.mrb[0].mxu0
  %1570 = vdwg.mxu0
  %v1572 = vsel %vm62, %v1169, 0
  %v1575 = vsel %vm62, %v1171, 0
  %1577 = vmatprep.subr.mxu0 0.0
  %1578 = vmatpush1.msra.mxu0 %v952
  %1579 = vmatprep.subr.mxu0 0.0
  %1580 = vmatpush1.msra.mxu0 %v957
  %1581 = vmatprep.subr.mxu0 0.0
  %1582 = vmatpush1.msra.mxu0 0.0
  %1583 = vmatprep.subr.mxu0 0.0
  %1584 = vmatpush1.msra.mxu0 0.0
  %1585 = vmatprep.subr.mxu0 0.0
  %1586 = vmatpush1.msra.mxu0 0.0
  %1587 = vmatprep.subr.mxu0 0.0
  %1588 = vmatpush1.msra.mxu0 0.0
  %1589 = vmatprep.subr.mxu0 0.0
  %1590 = vmatpush1.msra.mxu0 0.0
  %1591 = vmatprep.subr.mxu0 0.0
  %1592 = vmatpush1.msra.mxu0 0.0
  %1593 = vmatprep.subr.mxu0 0.0
  %1594 = vmatpush1.msra.mxu0 0.0
  %1595 = vmatprep.subr.mxu0 0.0
  %1596 = vmatpush1.msra.mxu0 0.0
  %1597 = vmatprep.subr.mxu0 0.0
  %1598 = vmatpush1.msra.mxu0 0.0
  %1599 = vmatprep.subr.mxu0 0.0
  %1600 = vmatpush1.msra.mxu0 0.0
  %1601 = vmatprep.subr.mxu0 0.0
  %1602 = vmatpush1.msra.mxu0 0.0
  %1603 = vmatprep.subr.mxu0 0.0
  %1604 = vmatpush1.msra.mxu0 0.0
  %1605 = vmatprep.subr.mxu0 0.0
  %1606 = vmatpush1.msra.mxu0 0.0
  %1607 = vmatprep.subr.mxu0 0.0
  %1608 = vmatpush1.msra.mxu0 0.0
  %1609 = vmatprep.subr.mxu0 0.0
  %1610 = vmatpush1.msra.mxu0 0.0
  %1611 = vmatprep.subr.mxu0 0.0
  %1612 = vmatpush1.msra.mxu0 0.0
  %1613 = vmatprep.subr.mxu0 0.0
  %1614 = vmatpush1.msra.mxu0 0.0
  %1615 = vmatprep.subr.mxu0 0.0
  %1616 = vmatpush1.msra.mxu0 0.0
  %1617 = vmatprep.subr.mxu0 0.0
  %1618 = vmatpush1.msra.mxu0 0.0
  %1619 = vmatprep.subr.mxu0 0.0
  %1620 = vmatpush1.msra.mxu0 0.0
  %1621 = vmatprep.subr.mxu0 0.0
  %1622 = vmatpush1.msra.mxu0 0.0
  %1623 = vmatprep.subr.mxu0 0.0
  %1624 = vmatpush1.msra.mxu0 0.0
  %1625 = vmatprep.subr.mxu0 0.0
  %1626 = vmatpush1.msra.mxu0 0.0
  %1627 = vmatprep.subr.mxu0 0.0
  %1628 = vmatpush1.msra.mxu0 0.0
  %1629 = vmatprep.subr.mxu0 0.0
  %1630 = vmatpush1.msra.mxu0 0.0
  %1631 = vmatprep.subr.mxu0 0.0
  %1632 = vmatpush1.msra.mxu0 0.0
  %1633 = vmatprep.subr.mxu0 0.0
  %1634 = vmatpush1.msra.mxu0 0.0
  %1635 = vmatprep.subr.mxu0 0.0
  %1636 = vmatpush1.msra.mxu0 0.0
  %1637 = vmatprep.subr.mxu0 0.0
  %1638 = vmatpush1.msra.mxu0 0.0
  %1639 = vmatprep.subr.mxu0 0.0
  %1640 = vmatpush1.msra.mxu0 0.0
  %1641 = vmatprep.mubr.f32.mxu0 0.0
  %1642 = vmatmul.mubr.f32.gmra.mrb[0].mxu0 %v1572
  %v1643 = vpop.f32.mrb[0].mxu0
  %v1644 = vadd.f32 %v1297, %v1643
  %v1645 = vpop.f32.mrb[0].mxu0
  %1646 = vmatprep.mubr.f32.mxu0 0.0
  %1647 = vmatmul.mubr.f32.gmra.mrb[0].mxu0 %v1575
  %v1648 = vpop.f32.mrb[0].mxu0
  %v1649 = vadd.f32 %v1302, %v1648
  %v1650 = vpop.f32.mrb[0].mxu0
  %1651 = vdwg.mxu0
  %v1652 = vadd.f32 %v1644, %v1430
  %v1653 = vadd.f32 %v1649, %v1435
  %v1654 = vadd.f32 %v1652, %v1563
  %v1655 = vadd.f32 %v1653, %v1568
  %v1656 = vmul.f32 %v1654, 0.25
  %v1657 = vmul.f32 %v1655, 0.25
  %v1658 = vld [vmem:[%s10] sm:$0x1]
  %v1660 = vlaneseq
  %v1661 = vshrl.u32 %v1660, 7
  %v1662 = vsub.s32 0, %v1661
  %v1663 = vrot.slane %v1658, %v1662
  %v1665 = vadd.f32 %v1656, %v1663
  %v1666 = vadd.f32 %v1657, %v1663
  %v1667 = vld [vmem:[%s0] sm:$0xff]
  %v1668 = vlaneseq
  %v1669 = vand.u32 %v1668, 127
  %1670 = vset.pattern.permute.xlu0 0
  %1671 = vperm.xlu0 %1670, %v1667
  %v1672 = vpop.permute.xlu0 %1671
  %vm1673 = vcmp.eq.s32.totalorder %v1669, %v1672
  %v1674 = vsel %vm1673, 1, 0
  %v1675 = vcvt.s32.f32 %v1674
  %1676 = vset.pattern.permute.xlu0 1
  %1677 = vperm.xlu0 %1676, %v1667
  %v1678 = vpop.permute.xlu0 %1677
  %vm1679 = vcmp.eq.s32.totalorder %v1669, %v1678
  %v1680 = vsel %vm1679, 1, 0
  %v1681 = vcvt.s32.f32 %v1680
  %v1683 = vsel %vm62, %v1675, 0
  %1685 = vmatprep.subr.mxu0 0.0
  %1686 = vmatpush1.msra.mxu0 %v1665
  %1687 = vmatprep.subr.mxu0 0.0
  %1688 = vmatpush1.msra.mxu0 %v1666
  %1689 = vmatprep.subr.mxu0 0.0
  %1690 = vmatpush1.msra.mxu0 0.0
  %1691 = vmatprep.subr.mxu0 0.0
  %1692 = vmatpush1.msra.mxu0 0.0
  %1693 = vmatprep.subr.mxu0 0.0
  %1694 = vmatpush1.msra.mxu0 0.0
  %1695 = vmatprep.subr.mxu0 0.0
  %1696 = vmatpush1.msra.mxu0 0.0
  %1697 = vmatprep.subr.mxu0 0.0
  %1698 = vmatpush1.msra.mxu0 0.0
  %1699 = vmatprep.subr.mxu0 0.0
  %1700 = vmatpush1.msra.mxu0 0.0
  %1701 = vmatprep.subr.mxu0 0.0
  %1702 = vmatpush1.msra.mxu0 0.0
  %1703 = vmatprep.subr.mxu0 0.0
  %1704 = vmatpush1.msra.mxu0 0.0
  %1705 = vmatprep.subr.mxu0 0.0
  %1706 = vmatpush1.msra.mxu0 0.0
  %1707 = vmatprep.subr.mxu0 0.0
  %1708 = vmatpush1.msra.mxu0 0.0
  %1709 = vmatprep.subr.mxu0 0.0
  %1710 = vmatpush1.msra.mxu0 0.0
  %1711 = vmatprep.subr.mxu0 0.0
  %1712 = vmatpush1.msra.mxu0 0.0
  %1713 = vmatprep.subr.mxu0 0.0
  %1714 = vmatpush1.msra.mxu0 0.0
  %1715 = vmatprep.subr.mxu0 0.0
  %1716 = vmatpush1.msra.mxu0 0.0
  %1717 = vmatprep.subr.mxu0 0.0
  %1718 = vmatpush1.msra.mxu0 0.0
  %1719 = vmatprep.subr.mxu0 0.0
  %1720 = vmatpush1.msra.mxu0 0.0
  %1721 = vmatprep.subr.mxu0 0.0
  %1722 = vmatpush1.msra.mxu0 0.0
  %1723 = vmatprep.subr.mxu0 0.0
  %1724 = vmatpush1.msra.mxu0 0.0
  %1725 = vmatprep.subr.mxu0 0.0
  %1726 = vmatpush1.msra.mxu0 0.0
  %1727 = vmatprep.subr.mxu0 0.0
  %1728 = vmatpush1.msra.mxu0 0.0
  %1729 = vmatprep.subr.mxu0 0.0
  %1730 = vmatpush1.msra.mxu0 0.0
  %1731 = vmatprep.subr.mxu0 0.0
  %1732 = vmatpush1.msra.mxu0 0.0
  %1733 = vmatprep.subr.mxu0 0.0
  %1734 = vmatpush1.msra.mxu0 0.0
  %1735 = vmatprep.subr.mxu0 0.0
  %1736 = vmatpush1.msra.mxu0 0.0
  %1737 = vmatprep.subr.mxu0 0.0
  %1738 = vmatpush1.msra.mxu0 0.0
  %1739 = vmatprep.subr.mxu0 0.0
  %1740 = vmatpush1.msra.mxu0 0.0
  %1741 = vmatprep.subr.mxu0 0.0
  %1742 = vmatpush1.msra.mxu0 0.0
  %1743 = vmatprep.subr.mxu0 0.0
  %1744 = vmatpush1.msra.mxu0 0.0
  %1745 = vmatprep.subr.mxu0 0.0
  %1746 = vmatpush1.msra.mxu0 0.0
  %1747 = vmatprep.subr.mxu0 0.0
  %1748 = vmatpush1.msra.mxu0 0.0
  %1749 = vmatprep.mubr.f32.mxu0 0.0
  %1750 = vmatmul.mubr.f32.gmra.mrb[0].mxu0 %v1683
  %v1751 = vpop.f32.mrb[0].mxu0
  %v1752 = vadd.f32 0.0, %v1751
  %v1753 = vpop.f32.mrb[0].mxu0
  %1754 = vdwg.mxu0
  %v1756 = vsel %vm62, %v1681, 0
  %1758 = vmatprep.subr.mxu0 0.0
  %1759 = vmatpush1.msra.mxu0 %v1665
  %1760 = vmatprep.subr.mxu0 0.0
  %1761 = vmatpush1.msra.mxu0 %v1666
  %1762 = vmatprep.subr.mxu0 0.0
  %1763 = vmatpush1.msra.mxu0 0.0
  %1764 = vmatprep.subr.mxu0 0.0
  %1765 = vmatpush1.msra.mxu0 0.0
  %1766 = vmatprep.subr.mxu0 0.0
  %1767 = vmatpush1.msra.mxu0 0.0
  %1768 = vmatprep.subr.mxu0 0.0
  %1769 = vmatpush1.msra.mxu0 0.0
  %1770 = vmatprep.subr.mxu0 0.0
  %1771 = vmatpush1.msra.mxu0 0.0
  %1772 = vmatprep.subr.mxu0 0.0
  %1773 = vmatpush1.msra.mxu0 0.0
  %1774 = vmatprep.subr.mxu0 0.0
  %1775 = vmatpush1.msra.mxu0 0.0
  %1776 = vmatprep.subr.mxu0 0.0
  %1777 = vmatpush1.msra.mxu0 0.0
  %1778 = vmatprep.subr.mxu0 0.0
  %1779 = vmatpush1.msra.mxu0 0.0
  %1780 = vmatprep.subr.mxu0 0.0
  %1781 = vmatpush1.msra.mxu0 0.0
  %1782 = vmatprep.subr.mxu0 0.0
  %1783 = vmatpush1.msra.mxu0 0.0
  %1784 = vmatprep.subr.mxu0 0.0
  %1785 = vmatpush1.msra.mxu0 0.0
  %1786 = vmatprep.subr.mxu0 0.0
  %1787 = vmatpush1.msra.mxu0 0.0
  %1788 = vmatprep.subr.mxu0 0.0
  %1789 = vmatpush1.msra.mxu0 0.0
  %1790 = vmatprep.subr.mxu0 0.0
  %1791 = vmatpush1.msra.mxu0 0.0
  %1792 = vmatprep.subr.mxu0 0.0
  %1793 = vmatpush1.msra.mxu0 0.0
  %1794 = vmatprep.subr.mxu0 0.0
  %1795 = vmatpush1.msra.mxu0 0.0
  %1796 = vmatprep.subr.mxu0 0.0
  %1797 = vmatpush1.msra.mxu0 0.0
  %1798 = vmatprep.subr.mxu0 0.0
  %1799 = vmatpush1.msra.mxu0 0.0
  %1800 = vmatprep.subr.mxu0 0.0
  %1801 = vmatpush1.msra.mxu0 0.0
  %1802 = vmatprep.subr.mxu0 0.0
  %1803 = vmatpush1.msra.mxu0 0.0
  %1804 = vmatprep.subr.mxu0 0.0
  %1805 = vmatpush1.msra.mxu0 0.0
  %1806 = vmatprep.subr.mxu0 0.0
  %1807 = vmatpush1.msra.mxu0 0.0
  %1808 = vmatprep.subr.mxu0 0.0
  %1809 = vmatpush1.msra.mxu0 0.0
  %1810 = vmatprep.subr.mxu0 0.0
  %1811 = vmatpush1.msra.mxu0 0.0
  %1812 = vmatprep.subr.mxu0 0.0
  %1813 = vmatpush1.msra.mxu0 0.0
  %1814 = vmatprep.subr.mxu0 0.0
  %1815 = vmatpush1.msra.mxu0 0.0
  %1816 = vmatprep.subr.mxu0 0.0
  %1817 = vmatpush1.msra.mxu0 0.0
  %1818 = vmatprep.subr.mxu0 0.0
  %1819 = vmatpush1.msra.mxu0 0.0
  %1820 = vmatprep.subr.mxu0 0.0
  %1821 = vmatpush1.msra.mxu0 0.0
  %1822 = vmatprep.mubr.f32.mxu0 0.0
  %1823 = vmatmul.mubr.f32.gmra.mrb[0].mxu0 %v1756
  %v1824 = vpop.f32.mrb[0].mxu0
  %v1825 = vadd.f32 0.0, %v1824
  %v1826 = vpop.f32.mrb[0].mxu0
  %1827 = vdwg.mxu0
  %1829 = vrot.lane.b32.xlu0 %v1825, 16
  %v1830 = vpop.permute.xlu0 %1829
  %v1832 = vsel %vm62, %v1752, %v1830
  %v1833 = vld [vmem:[%s11] sm:$0xff]
  %v1834 = vld [vmem:[%s11 + $0x8] sm:$0xff]
  %v1835 = vld [vmem:[%s11 + $0x10] sm:$0xff]
  %v1836 = vld [vmem:[%s11 + $0x18] sm:$0xff]
  %v1837 = vld [vmem:[%s12] sm:$0x1]
  %v1839 = vlaneseq
  %v1840 = vshrl.u32 %v1839, 7
  %v1841 = vsub.s32 0, %v1840
  %v1842 = vrot.slane %v1837, %v1841
  %v1845 = vsel %vm149, %v1832, 0
  %1847 = vmatprep.subr.mxu0 0.0
  %1848 = vmatpush1.msra.mxu0 %v1833
  %1849 = vmatprep.subr.mxu0 0.0
  %1850 = vmatpush1.msra.mxu0 %v1834
  %1851 = vmatprep.subr.mxu0 0.0
  %1852 = vmatpush1.msra.mxu0 %v1835
  %1853 = vmatprep.subr.mxu0 0.0
  %1854 = vmatpush1.msra.mxu0 %v1836
  %1855 = vmatprep.subr.mxu0 0.0
  %1856 = vmatpush1.msra.mxu0 0.0
  %1857 = vmatprep.subr.mxu0 0.0
  %1858 = vmatpush1.msra.mxu0 0.0
  %1859 = vmatprep.subr.mxu0 0.0
  %1860 = vmatpush1.msra.mxu0 0.0
  %1861 = vmatprep.subr.mxu0 0.0
  %1862 = vmatpush1.msra.mxu0 0.0
  %1863 = vmatprep.subr.mxu0 0.0
  %1864 = vmatpush1.msra.mxu0 0.0
  %1865 = vmatprep.subr.mxu0 0.0
  %1866 = vmatpush1.msra.mxu0 0.0
  %1867 = vmatprep.subr.mxu0 0.0
  %1868 = vmatpush1.msra.mxu0 0.0
  %1869 = vmatprep.subr.mxu0 0.0
  %1870 = vmatpush1.msra.mxu0 0.0
  %1871 = vmatprep.subr.mxu0 0.0
  %1872 = vmatpush1.msra.mxu0 0.0
  %1873 = vmatprep.subr.mxu0 0.0
  %1874 = vmatpush1.msra.mxu0 0.0
  %1875 = vmatprep.subr.mxu0 0.0
  %1876 = vmatpush1.msra.mxu0 0.0
  %1877 = vmatprep.subr.mxu0 0.0
  %1878 = vmatpush1.msra.mxu0 0.0
  %1879 = vmatprep.subr.mxu0 0.0
  %1880 = vmatpush1.msra.mxu0 0.0
  %1881 = vmatprep.subr.mxu0 0.0
  %1882 = vmatpush1.msra.mxu0 0.0
  %1883 = vmatprep.subr.mxu0 0.0
  %1884 = vmatpush1.msra.mxu0 0.0
  %1885 = vmatprep.subr.mxu0 0.0
  %1886 = vmatpush1.msra.mxu0 0.0
  %1887 = vmatprep.subr.mxu0 0.0
  %1888 = vmatpush1.msra.mxu0 0.0
  %1889 = vmatprep.subr.mxu0 0.0
  %1890 = vmatpush1.msra.mxu0 0.0
  %1891 = vmatprep.subr.mxu0 0.0
  %1892 = vmatpush1.msra.mxu0 0.0
  %1893 = vmatprep.subr.mxu0 0.0
  %1894 = vmatpush1.msra.mxu0 0.0
  %1895 = vmatprep.subr.mxu0 0.0
  %1896 = vmatpush1.msra.mxu0 0.0
  %1897 = vmatprep.subr.mxu0 0.0
  %1898 = vmatpush1.msra.mxu0 0.0
  %1899 = vmatprep.subr.mxu0 0.0
  %1900 = vmatpush1.msra.mxu0 0.0
  %1901 = vmatprep.subr.mxu0 0.0
  %1902 = vmatpush1.msra.mxu0 0.0
  %1903 = vmatprep.subr.mxu0 0.0
  %1904 = vmatpush1.msra.mxu0 0.0
  %1905 = vmatprep.subr.mxu0 0.0
  %1906 = vmatpush1.msra.mxu0 0.0
  %1907 = vmatprep.subr.mxu0 0.0
  %1908 = vmatpush1.msra.mxu0 0.0
  %1909 = vmatprep.subr.mxu0 0.0
  %1910 = vmatpush1.msra.mxu0 0.0
  %1911 = vmatprep.mubr.f32.mxu0 0.0
  %1912 = vmatmul.mubr.f32.gmra.mrb[0].mxu0 %v1845
  %v1913 = vpop.f32.mrb[0].mxu0
  %v1914 = vadd.f32 %v1842, %v1913
  %v1915 = vpop.f32.mrb[0].mxu0
  %1916 = vdwg.mxu0
  %v1917 = vmax.f32 %v1914, 0.0
  %v1918 = vld [vmem:[%s13] sm:$0x1]
  %v1920 = vlaneseq
  %v1921 = vshrl.u32 %v1920, 7
  %v1922 = vsub.s32 0, %v1921
  %v1923 = vrot.slane %v1918, %v1922
  %v1925 = vmul.f32 %v1917, %v1923
  %v1926 = vsel %vm969, %v1925, 0.0
  %1927 = vadd.xlane.f32.xlu0 %v1926
  %v1928 = vpop.xlane.xlu0 %1927
  %v1929 = vld [vmem:[#allocation2] sm:$0x1]
  %v1931 = vlaneseq
  %v1932 = vshrl.u32 %v1931, 7
  %v1933 = vsub.s32 0, %v1932
  %v1934 = vrot.slane %v1929, %v1933
  %v1936 = vadd.f32 %v1928, %v1934
  %vm1937 = vcmask 7168
  %1938 = vst.msk [vmem:[%s15] sm:$0xff] %vm1937, %v1936
  // Predicated region
  $region62: #{tpu_custom_call.1} parent=0 // pred_check
    _
  $region63: #{tpu_custom_call.1} parent=0 // pred_check_branch
    %1940 = sbr.rel (0) target = $region65
  $region64: #{tpu_custom_call.1} parent=0 // pred_region
    _
  $region65: #{tpu_custom_call.1} parent=0 // pred_fallthru
    _
  // Predicated region
  $region66: #{tpu_custom_call.1} parent=0 // pred_check
    _
  $region67: #{tpu_custom_call.1} parent=0 // pred_check_branch
    %1942 = sbr.rel (0) target = $region69
  $region68: #{tpu_custom_call.1} parent=0 // pred_region
    _
  $region69: #{tpu_custom_call.1} parent=0 // pred_fallthru
    _

</llo_original>
